<compile_context>
chip_gen: v5e
topology: v5e:2x2
jax: 0.10.0
libtpu: 0.0.40
codegen_flags: <defaults>
</compile_context>

<pallas_src>
import jax
import jax.numpy as jnp
from jax import lax
from jax.experimental import pallas as pl
from jax.experimental.pallas import tpu as pltpu

VMEM_LIMIT = 32 * 1024 * 1024  # safe on v5e / v6e / v7x (64 MiB phys)
LAT_PAD = 128                  # lane-dense latent width


# ----------------------------- Pallas kernels -----------------------------

def gcn_layer1_kernel(a_ref, xs_ref, d_ref, w1_ref, b1_ref, w2_ref,
                      g_ref, acc_ref):
    """Layer 1 + layer-2 input prep.

    Accumulates (A+I) @ (D^-1/2 X) over the k grid axis; on the last k step
    applies the row D^-1/2, the dense W1 / bias / ReLU / W2 epilogue and
    pre-scales by D^-1/2 for layer 2:  G_s = D^-1/2 (relu(A_hat X W1 + b1) W2).
    """
    k = pl.program_id(1)

    @pl.when(k == 0)
    def _init():
        acc_ref[...] = jnp.zeros_like(acc_ref)

    acc_ref[...] += jnp.dot(a_ref[...], xs_ref[...],
                            preferred_element_type=jnp.float32)

    @pl.when(k == pl.num_programs(1) - 1)
    def _finalize():
        ax = acc_ref[...] * d_ref[...]                        # = (A_hat @ X) rows
        h = jnp.maximum(
            jnp.dot(ax, w1_ref[...], preferred_element_type=jnp.float32)
            + b1_ref[...], 0.0)
        g = jnp.dot(h, w2_ref[...], preferred_element_type=jnp.float32)
        g_ref[...] = (g * d_ref[...]).astype(g_ref.dtype)     # bf16, pre-scaled


def gcn_layer2_kernel(a_ref, gs_ref, d_ref, b2_ref, z_ref, acc_ref):
    """Layer 2:  Z = D^-1/2 ((A+I) @ G_s) + b2  ( = A_hat @ (H W2) + b2 )."""
    k = pl.program_id(1)

    @pl.when(k == 0)
    def _init():
        acc_ref[...] = jnp.zeros_like(acc_ref)

    acc_ref[...] += jnp.dot(a_ref[...], gs_ref[...],
                            preferred_element_type=jnp.float32)

    @pl.when(k == pl.num_programs(1) - 1)
    def _finalize():
        z_ref[...] = (acc_ref[...] * d_ref[...] + b2_ref[...]).astype(z_ref.dtype)


def inner_product_decoder_kernel(zr_ref, zc_ref, mask_ref, out_ref):
    """Masked inner-product decoder tile: sigmoid(z_r z_c^T) * mask."""
    logits = lax.dot_general(
        zr_ref[...], zc_ref[...],
        dimension_numbers=(((1,), (1,)), ((), ())),   # contract latent dim; no z.T
        preferred_element_type=jnp.float32)
    # sigmoid(x) = 0.5 * (tanh(x/2) + 1): one EUP op per element (vs exp+recip);
    # the extra mul/add ride free on the VPU.
    sig = 0.5 * jnp.tanh(0.5 * logits) + 0.5
    out_ref[...] = sig * mask_ref[...].astype(jnp.float32)


# ------------------------------- Wrappers ----------------------------------

def _round_up(x, m):
    return (x + m - 1) // m * m


def _pick_tile(n, target):
    """Largest multiple of 128 <= target that divides n (n is a multiple of 128)."""
    t = min(target, n)
    while n % t:
        t -= 128
    return t


def _gcn_layer1(adj, xs, d, w1, b1, w2):
    n_pad, f_in = xs.shape
    hidden = w1.shape[1]
    lat = w2.shape[1]
    tm = _pick_tile(n_pad, 512)
    tk = _pick_tile(n_pad, 2048)
    return pl.pallas_call(
        gcn_layer1_kernel,
        out_shape=jax.ShapeDtypeStruct((n_pad, lat), jnp.bfloat16),
        grid=(n_pad // tm, n_pad // tk),
        in_specs=[
            pl.BlockSpec((tm, tk), lambda i, k: (i, k)),        # (A+I) tile, bf16
            pl.BlockSpec((tk, f_in), lambda i, k: (k, 0)),      # D^-1/2 X tile
            pl.BlockSpec((tm, 1), lambda i, k: (i, 0)),         # D^-1/2 rows
            pl.BlockSpec((f_in, hidden), lambda i, k: (0, 0)),  # W1 (resident)
            pl.BlockSpec((1, hidden), lambda i, k: (0, 0)),     # b1
            pl.BlockSpec((hidden, lat), lambda i, k: (0, 0)),   # W2 (padded)
        ],
        out_specs=pl.BlockSpec((tm, lat), lambda i, k: (i, 0)),
        scratch_shapes=[pltpu.VMEM((tm, f_in), jnp.float32)],
        compiler_params=pltpu.CompilerParams(
            dimension_semantics=("parallel", "arbitrary"),
            vmem_limit_bytes=VMEM_LIMIT),
    )(adj, xs, d, w1, b1, w2)


def _gcn_layer2(adj, gs, d, b2):
    n_pad, lat = gs.shape
    tm = _pick_tile(n_pad, 512)
    tk = _pick_tile(n_pad, 2048)
    return pl.pallas_call(
        gcn_layer2_kernel,
        out_shape=jax.ShapeDtypeStruct((n_pad, lat), jnp.bfloat16),
        grid=(n_pad // tm, n_pad // tk),
        in_specs=[
            pl.BlockSpec((tm, tk), lambda i, k: (i, k)),        # (A+I) tile, bf16
            pl.BlockSpec((tk, lat), lambda i, k: (k, 0)),       # G_s tile, bf16
            pl.BlockSpec((tm, 1), lambda i, k: (i, 0)),         # D^-1/2 rows
            pl.BlockSpec((1, lat), lambda i, k: (0, 0)),        # b2 (padded)
        ],
        out_specs=pl.BlockSpec((tm, lat), lambda i, k: (i, 0)),
        scratch_shapes=[pltpu.VMEM((tm, lat), jnp.float32)],
        compiler_params=pltpu.CompilerParams(
            dimension_semantics=("parallel", "arbitrary"),
            vmem_limit_bytes=VMEM_LIMIT),
    )(adj, gs, d, b2)


def _decode(z, mask_i8):
    n_pad, lat = z.shape
    tm = _pick_tile(n_pad, 512)    # bigger row block -> fewer z-col re-reads
    tn = _pick_tile(n_pad, 2048)   # lane-dense output tiles
    return pl.pallas_call(
        inner_product_decoder_kernel,
        out_shape=jax.ShapeDtypeStruct((n_pad, n_pad), jnp.float32),
        grid=(n_pad // tm, n_pad // tn),
        in_specs=[
            pl.BlockSpec((tm, lat), lambda i, j: (i, 0)),       # z row block (bf16)
            pl.BlockSpec((tn, lat), lambda i, j: (j, 0)),       # z col block (bf16)
            pl.BlockSpec((tm, tn), lambda i, j: (i, j)),        # mask (int8)
        ],
        out_specs=pl.BlockSpec((tm, tn), lambda i, j: (i, j)),
        compiler_params=pltpu.CompilerParams(
            dimension_semantics=("parallel", "parallel"),
            vmem_limit_bytes=VMEM_LIMIT),
    )(z, z, mask_i8)


def gae_forward(x, edge_index, edge_attr, mask, params):
    """Mirrors GAE.forward(x, edge_index, edge_attr, mask)."""
    n, f_in = x.shape
    hidden = params["w1"].shape[1]
    f_lat = params["w2"].shape[1]
    n_pad = _round_up(max(n, 128), 128)

    # ---- glue: raw (A+I) adjacency + D^-1/2 from COO edges ----------------
    # TODO(synk): the COO scatter-add (data-dependent writes) stays in plain
    # JAX; the kernels consume the dense bf16 (A+I) and the degree vector.
    # Self-loop edges are appended so ONE scatter builds (A+I) directly at the
    # padded shape in bf16 (no dense f32 intermediate / extra pad-cast pass).
    loops = jnp.arange(n, dtype=edge_index.dtype)
    src = jnp.concatenate([edge_index[0], loops])
    dst = jnp.concatenate([edge_index[1], loops])
    w = jnp.concatenate([edge_attr, jnp.ones((n,), edge_attr.dtype)])
    adj_p = jnp.zeros((n_pad, n_pad), jnp.bfloat16).at[src, dst].add(
        w.astype(jnp.bfloat16))
    # Exact f32 degrees straight from the edge list (no dense row-sum pass).
    deg = jnp.zeros((n,), jnp.float32).at[src].add(w.astype(jnp.float32))
    d = jnp.where(deg > 0.0, lax.rsqrt(deg), 0.0)             # [n]

    # ---- pad to TPU-friendly shapes (multiples of 128; latent -> 128) ----
    xs_p = jnp.zeros((n_pad, f_in), jnp.bfloat16).at[:n, :].set(
        (x * d[:, None]).astype(jnp.bfloat16))                # D^-1/2 X, bf16
    d_p = jnp.zeros((n_pad, 1), jnp.float32).at[:n, 0].set(d)
    w1 = params["w1"].astype(jnp.float32)
    b1 = params["b1"].reshape(1, hidden).astype(jnp.float32)
    w2_p = jnp.zeros((hidden, LAT_PAD), jnp.float32).at[:, :f_lat].set(
        params["w2"])
    b2_p = jnp.zeros((1, LAT_PAD), jnp.float32).at[0, :f_lat].set(params["b2"])
    # Binary mask travels as int8 (4x less HBM read on the mem-bound decoder).
    mask_p = jnp.zeros((n_pad, n_pad), jnp.int8).at[:n, :n].set(
        mask.astype(jnp.int8))

    gs = _gcn_layer1(adj_p, xs_p, d_p, w1, b1, w2_p)   # [n_pad, 128] bf16
    z = _gcn_layer2(adj_p, gs, d_p, b2_p)              # [n_pad, 128] bf16
    out = _decode(z, mask_p)                           # [n_pad, n_pad] f32
    return out[:n, :n]


# --------------------------------- Main -------------------------------------

if __name__ == "__main__":
    N, F_IN, HIDDEN, F_LAT, E = 16, 8, 32, 16, 48

    key = jax.random.PRNGKey(0)
    k_x, k_src, k_dst, k_w, k_mask, k_w1, k_w2 = jax.random.split(key, 7)

    x = jax.random.normal(k_x, (N, F_IN), jnp.float32)
    src = jax.random.randint(k_src, (E,), 0, N)
    dst = jax.random.randint(k_dst, (E,), 0, N)
    edge_index = jnp.stack([src, dst], axis=0)                # [2, E]
    edge_attr = jax.random.uniform(k_w, (E,), jnp.float32)
    mask = (jax.random.uniform(k_mask, (N, N)) > 0.5).astype(jnp.float32)

    params = {
        "w1": jax.random.normal(k_w1, (F_IN, HIDDEN), jnp.float32)
              * jnp.sqrt(2.0 / (F_IN + HIDDEN)),
        "b1": jnp.zeros((HIDDEN,), jnp.float32),
        "w2": jax.random.normal(k_w2, (HIDDEN, F_LAT), jnp.float32)
              * jnp.sqrt(2.0 / (HIDDEN + F_LAT)),
        "b2": jnp.zeros((F_LAT,), jnp.float32),
    }

    out = jax.jit(gae_forward)(x, edge_index, edge_attr, mask, params)
    jax.block_until_ready(out)

    # Pure-JAX f32 reference for a sanity check (bf16 adjacency/z -> loose tol).
    adj = jnp.zeros((N, N), jnp.float32).at[edge_index[0], edge_index[1]].add(
        edge_attr) + jnp.eye(N)
    dref = jnp.where(adj.sum(1) > 0, 1.0 / jnp.sqrt(adj.sum(1)), 0.0)
    a_hat = adj * dref[:, None] * dref[None, :]
    h_ref = jnp.maximum(a_hat @ x @ params["w1"] + params["b1"], 0.0)
    z_ref = a_hat @ h_ref @ params["w2"] + params["b2"]
    out_ref = jax.nn.sigmoid(z_ref @ z_ref.T) * mask

    assert out.shape == (N, N) and out.dtype == jnp.float32
    assert bool(jnp.all(jnp.isfinite(out)))
    assert bool(jnp.max(jnp.abs(out - out_ref)) < 5e-2)
    print("KERNEL_OK")
</pallas_src>

<mosaic_0001>
module attributes {stable_mosaic.version = 11 : i64} {
  func.func @gcn_layer1_kernel(%arg0: i32, %arg1: i32, %arg2: memref<128x128xbf16, #tpu.memory_space<vmem>>, %arg3: memref<128x8xbf16, #tpu.memory_space<vmem>>, %arg4: memref<128x1xf32, #tpu.memory_space<vmem>>, %arg5: memref<8x32xf32, #tpu.memory_space<vmem>>, %arg6: memref<1x32xf32, #tpu.memory_space<vmem>>, %arg7: memref<32x128xf32, #tpu.memory_space<vmem>>, %arg8: memref<128x128xbf16, #tpu.memory_space<vmem>>, %arg9: memref<128x8xf32, #tpu.memory_space<vmem>>) attributes {dimension_semantics = [#tpu.dimension_semantics<parallel>, #tpu.dimension_semantics<arbitrary>], iteration_bounds = array<i64: 1, 1>, scalar_prefetch = 0 : i64, scratch_operands = 1 : i64, tpu.core_type = #tpu.core_type<tc>, window_params = [{transform_indices = @transform_0, window_bounds = array<i64: 128, 128>}, {transform_indices = @transform_1, window_bounds = array<i64: 128, 8>}, {transform_indices = @transform_2, window_bounds = array<i64: 128, 1>}, {pipeline_mode = #tpu.pipeline_mode<synchronous>, transform_indices = @transform_3, window_bounds = array<i64: 8, 32>}, {pipeline_mode = #tpu.pipeline_mode<synchronous>, transform_indices = @transform_4, window_bounds = array<i64: 1, 32>}, {pipeline_mode = #tpu.pipeline_mode<synchronous>, transform_indices = @transform_5, window_bounds = array<i64: 32, 128>}, {transform_indices = @transform_6, window_bounds = array<i64: 128, 128>}]} {
    %c0_i32 = arith.constant 0 : i32
    %0 = arith.cmpi eq, %arg1, %c0_i32 : i32
    %1 = arith.extui %0 : i1 to i32
    %c0_i32_0 = arith.constant 0 : i32
    %2 = arith.cmpi ne, %1, %c0_i32_0 : i32
    scf.if %2 {
      %cst_10 = arith.constant 0.000000e+00 : f32
      %12 = vector.broadcast %cst_10 : f32 to vector<128x8xf32>
      %c0_11 = arith.constant 0 : index
      %c0_12 = arith.constant 0 : index
      %13 = vector.load %arg9[%c0_11, %c0_12] : memref<128x8xf32, #tpu.memory_space<vmem>>, vector<128x8xf32>
      tpu.vector_store %arg9[%c0_11, %c0_12], %12 {strides = array<i32>} : memref<128x8xf32, #tpu.memory_space<vmem>>, vector<128x8xf32>,
    } else {
    }
    %c0 = arith.constant 0 : index
    %c0_1 = arith.constant 0 : index
    %3 = vector.load %arg9[%c0, %c0_1] : memref<128x8xf32, #tpu.memory_space<vmem>>, vector<128x8xf32>
    %c0_2 = arith.constant 0 : index
    %c0_3 = arith.constant 0 : index
    %4 = vector.load %arg2[%c0_2, %c0_3] : memref<128x128xbf16, #tpu.memory_space<vmem>>, vector<128x128xbf16>
    %c0_4 = arith.constant 0 : index
    %c0_5 = arith.constant 0 : index
    %5 = vector.load %arg3[%c0_4, %c0_5] : memref<128x8xbf16, #tpu.memory_space<vmem>>, vector<128x8xbf16>
    %cst = arith.constant dense<0.000000e+00> : vector<128x8xf32>
    %6 = tpu.matmul %4, %5, %cst {dimension_numbers = #tpu.dot_dimension_numbers<[1], [0], [0], [1], [0, 0, 1, 1], [], []>} : vector<128x128xbf16>, vector<128x8xbf16>, vector<128x8xf32> -> vector<128x8xf32>
    %7 = arith.addf %3, %6 : vector<128x8xf32>
    %c0_6 = arith.constant 0 : index
    %c0_7 = arith.constant 0 : index
    %8 = vector.load %arg9[%c0_6, %c0_7] : memref<128x8xf32, #tpu.memory_space<vmem>>, vector<128x8xf32>
    tpu.vector_store %arg9[%c0_6, %c0_7], %7 {strides = array<i32>} : memref<128x8xf32, #tpu.memory_space<vmem>>, vector<128x8xf32>,
    %c0_i32_8 = arith.constant 0 : i32
    %9 = arith.cmpi eq, %arg1, %c0_i32_8 : i32
    %10 = arith.extui %9 : i1 to i32
    %c0_i32_9 = arith.constant 0 : i32
    %11 = arith.cmpi ne, %10, %c0_i32_9 : i32
    scf.if %11 {
      %c0_10 = arith.constant 0 : index
      %c0_11 = arith.constant 0 : index
      %12 = vector.load %arg9[%c0_10, %c0_11] : memref<128x8xf32, #tpu.memory_space<vmem>>, vector<128x8xf32>
      %c0_12 = arith.constant 0 : index
      %c0_13 = arith.constant 0 : index
      %13 = vector.load %arg4[%c0_12, %c0_13] : memref<128x1xf32, #tpu.memory_space<vmem>>, vector<128x1xf32>
      %14 = vector.broadcast %13 : vector<128x1xf32> to vector<128x8xf32>
      %15 = arith.mulf %12, %14 : vector<128x8xf32>
      %c0_14 = arith.constant 0 : index
      %c0_15 = arith.constant 0 : index
      %16 = vector.load %arg5[%c0_14, %c0_15] : memref<8x32xf32, #tpu.memory_space<vmem>>, vector<8x32xf32>
      %cst_16 = arith.constant dense<0.000000e+00> : vector<128x32xf32>
      %17 = tpu.matmul %15, %16, %cst_16 {dimension_numbers = #tpu.dot_dimension_numbers<[1], [0], [0], [1], [0, 0, 1, 1], [], []>} : vector<128x8xf32>, vector<8x32xf32>, vector<128x32xf32> -> vector<128x32xf32>
      %c0_17 = arith.constant 0 : index
      %c0_18 = arith.constant 0 : index
      %18 = vector.load %arg6[%c0_17, %c0_18] : memref<1x32xf32, #tpu.memory_space<vmem>>, vector<1x32xf32>
      %19 = vector.broadcast %18 : vector<1x32xf32> to vector<128x32xf32>
      %20 = arith.addf %17, %19 : vector<128x32xf32>
      %cst_19 = arith.constant 0.000000e+00 : f32
      %21 = vector.broadcast %cst_19 : f32 to vector<128x32xf32>
      %22 = arith.maximumf %20, %21 : vector<128x32xf32>
      %c0_20 = arith.constant 0 : index
      %c0_21 = arith.constant 0 : index
      %23 = vector.load %arg7[%c0_20, %c0_21] : memref<32x128xf32, #tpu.memory_space<vmem>>, vector<32x128xf32>
      %cst_22 = arith.constant dense<0.000000e+00> : vector<128x128xf32>
      %24 = tpu.matmul %22, %23, %cst_22 {dimension_numbers = #tpu.dot_dimension_numbers<[1], [0], [0], [1], [0, 0, 1, 1], [], []>} : vector<128x32xf32>, vector<32x128xf32>, vector<128x128xf32> -> vector<128x128xf32>
      %c0_23 = arith.constant 0 : index
      %c0_24 = arith.constant 0 : index
      %25 = vector.load %arg4[%c0_23, %c0_24] : memref<128x1xf32, #tpu.memory_space<vmem>>, vector<128x1xf32>
      %26 = vector.broadcast %25 : vector<128x1xf32> to vector<128x128xf32>
      %27 = arith.mulf %24, %26 : vector<128x128xf32>
      %28 = arith.truncf %27 : vector<128x128xf32> to vector<128x128xbf16>
      %c0_25 = arith.constant 0 : index
      %c0_26 = arith.constant 0 : index
      %29 = vector.load %arg8[%c0_25, %c0_26] : memref<128x128xbf16, #tpu.memory_space<vmem>>, vector<128x128xbf16>
      tpu.vector_store %arg8[%c0_25, %c0_26], %28 {strides = array<i32>} : memref<128x128xbf16, #tpu.memory_space<vmem>>, vector<128x128xbf16>,
    } else {
    }
    return
  }
  func.func @transform_0(%arg0: i32, %arg1: i32) -> (i32, i32) {
    %c0_i32 = arith.constant 0 : i32
    return %arg0, %arg1 : i32, i32
  }
  func.func @transform_1(%arg0: i32, %arg1: i32) -> (i32, i32) {
    %c0_i32 = arith.constant 0 : i32
    %c0_i32_0 = arith.constant 0 : i32
    return %arg1, %c0_i32 : i32, i32
  }
  func.func @transform_2(%arg0: i32, %arg1: i32) -> (i32, i32) {
    %c0_i32 = arith.constant 0 : i32
    %c0_i32_0 = arith.constant 0 : i32
    return %arg0, %c0_i32 : i32, i32
  }
  func.func @transform_3(%arg0: i32, %arg1: i32) -> (i32, i32) {
    %c0_i32 = arith.constant 0 : i32
    %c0_i32_0 = arith.constant 0 : i32
    %c0_i32_1 = arith.constant 0 : i32
    return %c0_i32, %c0_i32_0 : i32, i32
  }
  func.func @transform_4(%arg0: i32, %arg1: i32) -> (i32, i32) {
    %c0_i32 = arith.constant 0 : i32
    %c0_i32_0 = arith.constant 0 : i32
    %c0_i32_1 = arith.constant 0 : i32
    return %c0_i32, %c0_i32_0 : i32, i32
  }
  func.func @transform_5(%arg0: i32, %arg1: i32) -> (i32, i32) {
    %c0_i32 = arith.constant 0 : i32
    %c0_i32_0 = arith.constant 0 : i32
    %c0_i32_1 = arith.constant 0 : i32
    return %c0_i32, %c0_i32_0 : i32, i32
  }
  func.func @transform_6(%arg0: i32, %arg1: i32) -> (i32, i32) {
    %c0_i32 = arith.constant 0 : i32
    %c0_i32_0 = arith.constant 0 : i32
    return %arg0, %c0_i32 : i32, i32
  }
}

module attributes {stable_mosaic.version = 11 : i64} {
  func.func @gcn_layer2_kernel(%arg0: i32, %arg1: i32, %arg2: memref<128x128xbf16, #tpu.memory_space<vmem>>, %arg3: memref<128x128xbf16, #tpu.memory_space<vmem>>, %arg4: memref<128x1xf32, #tpu.memory_space<vmem>>, %arg5: memref<1x128xf32, #tpu.memory_space<vmem>>, %arg6: memref<128x128xbf16, #tpu.memory_space<vmem>>, %arg7: memref<128x128xf32, #tpu.memory_space<vmem>>) attributes {dimension_semantics = [#tpu.dimension_semantics<parallel>, #tpu.dimension_semantics<arbitrary>], iteration_bounds = array<i64: 1, 1>, scalar_prefetch = 0 : i64, scratch_operands = 1 : i64, tpu.core_type = #tpu.core_type<tc>, window_params = [{transform_indices = @transform_0, window_bounds = array<i64: 128, 128>}, {transform_indices = @transform_1, window_bounds = array<i64: 128, 128>}, {transform_indices = @transform_2, window_bounds = array<i64: 128, 1>}, {pipeline_mode = #tpu.pipeline_mode<synchronous>, transform_indices = @transform_3, window_bounds = array<i64: 1, 128>}, {transform_indices = @transform_4, window_bounds = array<i64: 128, 128>}]} {
    %c0_i32 = arith.constant 0 : i32
    %0 = arith.cmpi eq, %arg1, %c0_i32 : i32
    %1 = arith.extui %0 : i1 to i32
    %c0_i32_0 = arith.constant 0 : i32
    %2 = arith.cmpi ne, %1, %c0_i32_0 : i32
    scf.if %2 {
      %cst_10 = arith.constant 0.000000e+00 : f32
      %12 = vector.broadcast %cst_10 : f32 to vector<128x128xf32>
      %c0_11 = arith.constant 0 : index
      %c0_12 = arith.constant 0 : index
      %13 = vector.load %arg7[%c0_11, %c0_12] : memref<128x128xf32, #tpu.memory_space<vmem>>, vector<128x128xf32>
      tpu.vector_store %arg7[%c0_11, %c0_12], %12 {strides = array<i32>} : memref<128x128xf32, #tpu.memory_space<vmem>>, vector<128x128xf32>,
    } else {
    }
    %c0 = arith.constant 0 : index
    %c0_1 = arith.constant 0 : index
    %3 = vector.load %arg7[%c0, %c0_1] : memref<128x128xf32, #tpu.memory_space<vmem>>, vector<128x128xf32>
    %c0_2 = arith.constant 0 : index
    %c0_3 = arith.constant 0 : index
    %4 = vector.load %arg2[%c0_2, %c0_3] : memref<128x128xbf16, #tpu.memory_space<vmem>>, vector<128x128xbf16>
    %c0_4 = arith.constant 0 : index
    %c0_5 = arith.constant 0 : index
    %5 = vector.load %arg3[%c0_4, %c0_5] : memref<128x128xbf16, #tpu.memory_space<vmem>>, vector<128x128xbf16>
    %cst = arith.constant dense<0.000000e+00> : vector<128x128xf32>
    %6 = tpu.matmul %4, %5, %cst {dimension_numbers = #tpu.dot_dimension_numbers<[1], [0], [0], [1], [0, 0, 1, 1], [], []>} : vector<128x128xbf16>, vector<128x128xbf16>, vector<128x128xf32> -> vector<128x128xf32>
    %7 = arith.addf %3, %6 : vector<128x128xf32>
    %c0_6 = arith.constant 0 : index
    %c0_7 = arith.constant 0 : index
    %8 = vector.load %arg7[%c0_6, %c0_7] : memref<128x128xf32, #tpu.memory_space<vmem>>, vector<128x128xf32>
    tpu.vector_store %arg7[%c0_6, %c0_7], %7 {strides = array<i32>} : memref<128x128xf32, #tpu.memory_space<vmem>>, vector<128x128xf32>,
    %c0_i32_8 = arith.constant 0 : i32
    %9 = arith.cmpi eq, %arg1, %c0_i32_8 : i32
    %10 = arith.extui %9 : i1 to i32
    %c0_i32_9 = arith.constant 0 : i32
    %11 = arith.cmpi ne, %10, %c0_i32_9 : i32
    scf.if %11 {
      %c0_10 = arith.constant 0 : index
      %c0_11 = arith.constant 0 : index
      %12 = vector.load %arg7[%c0_10, %c0_11] : memref<128x128xf32, #tpu.memory_space<vmem>>, vector<128x128xf32>
      %c0_12 = arith.constant 0 : index
      %c0_13 = arith.constant 0 : index
      %13 = vector.load %arg4[%c0_12, %c0_13] : memref<128x1xf32, #tpu.memory_space<vmem>>, vector<128x1xf32>
      %14 = vector.broadcast %13 : vector<128x1xf32> to vector<128x128xf32>
      %15 = arith.mulf %12, %14 : vector<128x128xf32>
      %c0_14 = arith.constant 0 : index
      %c0_15 = arith.constant 0 : index
      %16 = vector.load %arg5[%c0_14, %c0_15] : memref<1x128xf32, #tpu.memory_space<vmem>>, vector<1x128xf32>
      %17 = vector.broadcast %16 : vector<1x128xf32> to vector<128x128xf32>
      %18 = arith.addf %15, %17 : vector<128x128xf32>
      %19 = arith.truncf %18 : vector<128x128xf32> to vector<128x128xbf16>
      %c0_16 = arith.constant 0 : index
      %c0_17 = arith.constant 0 : index
      %20 = vector.load %arg6[%c0_16, %c0_17] : memref<128x128xbf16, #tpu.memory_space<vmem>>, vector<128x128xbf16>
      tpu.vector_store %arg6[%c0_16, %c0_17], %19 {strides = array<i32>} : memref<128x128xbf16, #tpu.memory_space<vmem>>, vector<128x128xbf16>,
    } else {
    }
    return
  }
  func.func @transform_0(%arg0: i32, %arg1: i32) -> (i32, i32) {
    %c0_i32 = arith.constant 0 : i32
    return %arg0, %arg1 : i32, i32
  }
  func.func @transform_1(%arg0: i32, %arg1: i32) -> (i32, i32) {
    %c0_i32 = arith.constant 0 : i32
    %c0_i32_0 = arith.constant 0 : i32
    return %arg1, %c0_i32 : i32, i32
  }
  func.func @transform_2(%arg0: i32, %arg1: i32) -> (i32, i32) {
    %c0_i32 = arith.constant 0 : i32
    %c0_i32_0 = arith.constant 0 : i32
    return %arg0, %c0_i32 : i32, i32
  }
  func.func @transform_3(%arg0: i32, %arg1: i32) -> (i32, i32) {
    %c0_i32 = arith.constant 0 : i32
    %c0_i32_0 = arith.constant 0 : i32
    %c0_i32_1 = arith.constant 0 : i32
    return %c0_i32, %c0_i32_0 : i32, i32
  }
  func.func @transform_4(%arg0: i32, %arg1: i32) -> (i32, i32) {
    %c0_i32 = arith.constant 0 : i32
    %c0_i32_0 = arith.constant 0 : i32
    return %arg0, %c0_i32 : i32, i32
  }
}

module attributes {stable_mosaic.version = 11 : i64} {
  func.func @inner_product_decoder_kernel(%arg0: i32, %arg1: i32, %arg2: memref<128x128xbf16, #tpu.memory_space<vmem>>, %arg3: memref<128x128xbf16, #tpu.memory_space<vmem>>, %arg4: memref<128x128xi8, #tpu.memory_space<vmem>>, %arg5: memref<128x128xf32, #tpu.memory_space<vmem>>) attributes {dimension_semantics = [#tpu.dimension_semantics<parallel>, #tpu.dimension_semantics<parallel>], iteration_bounds = array<i64: 1, 1>, scalar_prefetch = 0 : i64, scratch_operands = 0 : i64, tpu.core_type = #tpu.core_type<tc>, window_params = [{transform_indices = @transform_0, window_bounds = array<i64: 128, 128>}, {transform_indices = @transform_1, window_bounds = array<i64: 128, 128>}, {transform_indices = @transform_2, window_bounds = array<i64: 128, 128>}, {transform_indices = @transform_3, window_bounds = array<i64: 128, 128>}]} {
    %c0 = arith.constant 0 : index
    %c0_0 = arith.constant 0 : index
    %0 = vector.load %arg2[%c0, %c0_0] : memref<128x128xbf16, #tpu.memory_space<vmem>>, vector<128x128xbf16>
    %c0_1 = arith.constant 0 : index
    %c0_2 = arith.constant 0 : index
    %1 = vector.load %arg3[%c0_1, %c0_2] : memref<128x128xbf16, #tpu.memory_space<vmem>>, vector<128x128xbf16>
    %cst = arith.constant dense<0.000000e+00> : vector<128x128xf32>
    %2 = tpu.matmul %0, %1, %cst {dimension_numbers = #tpu.dot_dimension_numbers<[1], [1], [0], [0], [0, 0, 1, 0], [], []>} : vector<128x128xbf16>, vector<128x128xbf16>, vector<128x128xf32> -> vector<128x128xf32>
    %cst_3 = arith.constant 5.000000e-01 : f32
    %3 = vector.broadcast %cst_3 : f32 to vector<128x128xf32>
    %4 = arith.mulf %3, %2 : vector<128x128xf32>
    %5 = math.tanh %4 : vector<128x128xf32>
    %cst_4 = arith.constant 5.000000e-01 : f32
    %6 = vector.broadcast %cst_4 : f32 to vector<128x128xf32>
    %7 = arith.mulf %6, %5 : vector<128x128xf32>
    %cst_5 = arith.constant 5.000000e-01 : f32
    %8 = vector.broadcast %cst_5 : f32 to vector<128x128xf32>
    %9 = arith.addf %7, %8 : vector<128x128xf32>
    %c0_6 = arith.constant 0 : index
    %c0_7 = arith.constant 0 : index
    %10 = vector.load %arg4[%c0_6, %c0_7] : memref<128x128xi8, #tpu.memory_space<vmem>>, vector<128x128xi8>
    %11 = arith.sitofp %10 : vector<128x128xi8> to vector<128x128xf32>
    %12 = arith.mulf %9, %11 : vector<128x128xf32>
    %c0_8 = arith.constant 0 : index
    %c0_9 = arith.constant 0 : index
    %13 = vector.load %arg5[%c0_8, %c0_9] : memref<128x128xf32, #tpu.memory_space<vmem>>, vector<128x128xf32>
    tpu.vector_store %arg5[%c0_8, %c0_9], %12 {strides = array<i32>} : memref<128x128xf32, #tpu.memory_space<vmem>>, vector<128x128xf32>,
    return
  }
  func.func @transform_0(%arg0: i32, %arg1: i32) -> (i32, i32) {
    %c0_i32 = arith.constant 0 : i32
    %c0_i32_0 = arith.constant 0 : i32
    return %arg0, %c0_i32 : i32, i32
  }
  func.func @transform_1(%arg0: i32, %arg1: i32) -> (i32, i32) {
    %c0_i32 = arith.constant 0 : i32
    %c0_i32_0 = arith.constant 0 : i32
    return %arg1, %c0_i32 : i32, i32
  }
  func.func @transform_2(%arg0: i32, %arg1: i32) -> (i32, i32) {
    %c0_i32 = arith.constant 0 : i32
    return %arg0, %arg1 : i32, i32
  }
  func.func @transform_3(%arg0: i32, %arg1: i32) -> (i32, i32) {
    %c0_i32 = arith.constant 0 : i32
    return %arg0, %arg1 : i32, i32
  }
}

</mosaic_0001>

<llo_original>
// kernel: gae_forward.5
$region0: #{gae_forward.5}
  #allocation0 [shape = 'u32[]', space=smem, size = 0x4, offset = 0x4, fixed_abs, tag = 'smem constant byte address 0x4 - core index']
  #allocation1 [shape = 'u32[72,128]{1,0:T(1,128)}', space=vmem, size = 0x9000, scoped, tag = 'internal scratch']
  %s0 = inlined_call_operand.vmem [shape: bf16[128,128], index: 0, kind: input, shape index: {}, may-alias: {0,1}]
  %s1 = inlined_call_operand.vmem [shape: bf16[128,128], index: 1, kind: input, shape index: {}, may-alias: {0,1}]
  %s2 = inlined_call_operand.vmem [shape: s8[128,128], index: 2, kind: input, shape index: {}]
  %s3 = inlined_call_operand.vmem [shape: f32[128,128], index: 3, kind: output, shape index: {}]
  %s4 = sld [smem:[#allocation0]]
  $region22: #{gae_forward.5} parent=0
    _
  %s6 = ssub.s32 1, %s4
  %s7 = scalar_select 0, %s6, %s4
  // Predicated region
  $region2: #{gae_forward.5} parent=0 // pred_check
    _
  $region3: #{gae_forward.5} parent=0 // pred_check_branch
    %9 = sbr.rel (0) target = $region5
  $region4: #{gae_forward.5} parent=0 // pred_region
    _
  $region5: #{gae_forward.5} parent=0 // pred_fallthru
    _
  // Predicated region
  $region6: #{gae_forward.5} parent=0 // pred_check
    _
  $region7: #{gae_forward.5} parent=0 // pred_check_branch
    %11 = sbr.rel (0) target = $region9
  $region8: #{gae_forward.5} parent=0 // pred_region
    _
  $region9: #{gae_forward.5} parent=0 // pred_fallthru
    _
  // Predicated region
  $region10: #{gae_forward.5} parent=0 // pred_check
    _
  $region11: #{gae_forward.5} parent=0 // pred_check_branch
    %13 = sbr.rel (0) target = $region13
  $region12: #{gae_forward.5} parent=0 // pred_region
    _
  $region13: #{gae_forward.5} parent=0 // pred_fallthru
    _
  %v14 = vld [vmem:[%s0] sm:$0xf]
  %v15 = vld [vmem:[%s0 + $0x4] sm:$0xf]
  %v16 = vld [vmem:[%s0 + $0x8] sm:$0xf]
  %v17 = vld [vmem:[%s0 + $0xc] sm:$0xf]
  %v18 = vld [vmem:[%s0 + $0x10] sm:$0xf]
  %v19 = vld [vmem:[%s0 + $0x14] sm:$0xf]
  %v20 = vld [vmem:[%s0 + $0x18] sm:$0xf]
  %v21 = vld [vmem:[%s0 + $0x1c] sm:$0xf]
  %v22 = vld [vmem:[%s0 + $0x20] sm:$0xf]
  %v23 = vld [vmem:[%s0 + $0x24] sm:$0xf]
  %v24 = vld [vmem:[%s0 + $0x28] sm:$0xf]
  %v25 = vld [vmem:[%s0 + $0x2c] sm:$0xf]
  %v26 = vld [vmem:[%s0 + $0x30] sm:$0xf]
  %v27 = vld [vmem:[%s0 + $0x34] sm:$0xf]
  %v28 = vld [vmem:[%s0 + $0x38] sm:$0xf]
  %v29 = vld [vmem:[%s0 + $0x3c] sm:$0xf]
  %v30 = vld [vmem:[%s1] sm:$0xf]
  %v31 = vld [vmem:[%s1 + $0x4] sm:$0xf]
  %v32 = vld [vmem:[%s1 + $0x8] sm:$0xf]
  %v33 = vld [vmem:[%s1 + $0xc] sm:$0xf]
  %v34 = vld [vmem:[%s1 + $0x10] sm:$0xf]
  %v35 = vld [vmem:[%s1 + $0x14] sm:$0xf]
  %v36 = vld [vmem:[%s1 + $0x18] sm:$0xf]
  %v37 = vld [vmem:[%s1 + $0x1c] sm:$0xf]
  %v38 = vld [vmem:[%s1 + $0x20] sm:$0xf]
  %v39 = vld [vmem:[%s1 + $0x24] sm:$0xf]
  %v40 = vld [vmem:[%s1 + $0x28] sm:$0xf]
  %v41 = vld [vmem:[%s1 + $0x2c] sm:$0xf]
  %v42 = vld [vmem:[%s1 + $0x30] sm:$0xf]
  %v43 = vld [vmem:[%s1 + $0x34] sm:$0xf]
  %v44 = vld [vmem:[%s1 + $0x38] sm:$0xf]
  %v45 = vld [vmem:[%s1 + $0x3c] sm:$0xf]
  %v62 = vunpack.c.l.b16 %v14
  %v63 = vunpack.c.l.b16 %v15
  %v64 = vunpack.c.l.b16 %v16
  %v65 = vunpack.c.l.b16 %v17
  %v66 = vunpack.c.l.b16 %v18
  %v67 = vunpack.c.l.b16 %v19
  %v68 = vunpack.c.l.b16 %v20
  %v69 = vunpack.c.l.b16 %v21
  %v70 = vunpack.c.l.b16 %v22
  %v71 = vunpack.c.l.b16 %v23
  %v72 = vunpack.c.l.b16 %v24
  %v73 = vunpack.c.l.b16 %v25
  %v74 = vunpack.c.l.b16 %v26
  %v75 = vunpack.c.l.b16 %v27
  %v76 = vunpack.c.l.b16 %v28
  %v77 = vunpack.c.l.b16 %v29
  %v78 = vpack.c.b16 %v63, %v62
  %v79 = vpack.c.b16 %v65, %v64
  %v80 = vpack.c.b16 %v67, %v66
  %v81 = vpack.c.b16 %v69, %v68
  %v82 = vpack.c.b16 %v71, %v70
  %v83 = vpack.c.b16 %v73, %v72
  %v84 = vpack.c.b16 %v75, %v74
  %v85 = vpack.c.b16 %v77, %v76
  %v110 = vunpack.c.l.b16 %v30
  %v111 = vunpack.c.l.b16 %v31
  %v112 = vunpack.c.l.b16 %v32
  %v113 = vunpack.c.l.b16 %v33
  %v114 = vunpack.c.l.b16 %v34
  %v115 = vunpack.c.l.b16 %v35
  %v116 = vunpack.c.l.b16 %v36
  %v117 = vunpack.c.l.b16 %v37
  %v118 = vunpack.c.l.b16 %v38
  %v119 = vunpack.c.l.b16 %v39
  %v120 = vunpack.c.l.b16 %v40
  %v121 = vunpack.c.l.b16 %v41
  %v122 = vunpack.c.l.b16 %v42
  %v123 = vunpack.c.l.b16 %v43
  %v124 = vunpack.c.l.b16 %v44
  %v125 = vunpack.c.l.b16 %v45
  %v126 = vpack.c.b16 %v111, %v110
  %v127 = vpack.c.b16 %v113, %v112
  %v128 = vpack.c.b16 %v115, %v114
  %v129 = vpack.c.b16 %v117, %v116
  %v130 = vpack.c.b16 %v119, %v118
  %v131 = vpack.c.b16 %v121, %v120
  %v132 = vpack.c.b16 %v123, %v122
  %v133 = vpack.c.b16 %v125, %v124
  %142 = vmatpush.bf16.xpose.msra.mxu0 %v133
  %143 = vmatpush.bf16.xpose.msra.mxu0 %v132
  %144 = vmatpush.bf16.xpose.msra.mxu0 %v131
  %145 = vmatpush.bf16.xpose.msra.mxu0 %v130
  %146 = vmatpush.bf16.xpose.msra.mxu0 %v129
  %147 = vmatpush.bf16.xpose.msra.mxu0 %v128
  %148 = vmatpush.bf16.xpose.msra.mxu0 %v127
  %149 = vmatpush.bf16.xpose.msra.mxu0 %v126
  %150 = vmatmul.bf16.gmra.mxu0 %v78
  %v151 = vpop.f32.mrf.mxu0
  %v152 = vadd.f32 0.0, %v151
  %v153 = vpop.f32.mrf.mxu0
  %v154 = vadd.f32 0.0, %v153
  %155 = vmatmul.bf16.gmra.mxu0 %v79
  %v156 = vpop.f32.mrf.mxu0
  %v157 = vadd.f32 0.0, %v156
  %v158 = vpop.f32.mrf.mxu0
  %v159 = vadd.f32 0.0, %v158
  %160 = vmatmul.bf16.gmra.mxu0 %v80
  %v161 = vpop.f32.mrf.mxu0
  %v162 = vadd.f32 0.0, %v161
  %v163 = vpop.f32.mrf.mxu0
  %v164 = vadd.f32 0.0, %v163
  %165 = vmatmul.bf16.gmra.mxu0 %v81
  %v166 = vpop.f32.mrf.mxu0
  %v167 = vadd.f32 0.0, %v166
  %v168 = vpop.f32.mrf.mxu0
  %v169 = vadd.f32 0.0, %v168
  %170 = vmatmul.bf16.gmra.mxu0 %v82
  %v171 = vpop.f32.mrf.mxu0
  %v172 = vadd.f32 0.0, %v171
  %v173 = vpop.f32.mrf.mxu0
  %v174 = vadd.f32 0.0, %v173
  %175 = vmatmul.bf16.gmra.mxu0 %v83
  %v176 = vpop.f32.mrf.mxu0
  %v177 = vadd.f32 0.0, %v176
  %v178 = vpop.f32.mrf.mxu0
  %v179 = vadd.f32 0.0, %v178
  %180 = vmatmul.bf16.gmra.mxu0 %v84
  %v181 = vpop.f32.mrf.mxu0
  %v182 = vadd.f32 0.0, %v181
  %v183 = vpop.f32.mrf.mxu0
  %v184 = vadd.f32 0.0, %v183
  %185 = vmatmul.bf16.gmra.mxu0 %v85
  %v186 = vpop.f32.mrf.mxu0
  %v187 = vadd.f32 0.0, %v186
  %v188 = vpop.f32.mrf.mxu0
  %v189 = vadd.f32 0.0, %v188
  %190 = vdwg.mxu0
  %v191 = vmul.f32 %v152, 0.5
  %v192 = vmul.f32 %v154, 0.5
  %v193 = vmul.f32 %v157, 0.5
  %v194 = vmul.f32 %v159, 0.5
  %v195 = vmul.f32 %v162, 0.5
  %v196 = vmul.f32 %v164, 0.5
  %v197 = vmul.f32 %v167, 0.5
  %v198 = vmul.f32 %v169, 0.5
  %v199 = vmul.f32 %v172, 0.5
  %v200 = vmul.f32 %v174, 0.5
  %v201 = vmul.f32 %v177, 0.5
  %v202 = vmul.f32 %v179, 0.5
  %v203 = vmul.f32 %v182, 0.5
  %v204 = vmul.f32 %v184, 0.5
  %v205 = vmul.f32 %v187, 0.5
  %v206 = vmul.f32 %v189, 0.5
  %v207 = vtanh.pop %v191
  %v208 = vtanh.pop %v192
  %v209 = vtanh.pop %v193
  %v210 = vtanh.pop %v194
  %v211 = vtanh.pop %v195
  %v212 = vtanh.pop %v196
  %v213 = vtanh.pop %v197
  %v214 = vtanh.pop %v198
  %v215 = vtanh.pop %v199
  %v216 = vtanh.pop %v200
  %v217 = vtanh.pop %v201
  %v218 = vtanh.pop %v202
  %v219 = vtanh.pop %v203
  %v220 = vtanh.pop %v204
  %v221 = vtanh.pop %v205
  %v222 = vtanh.pop %v206
  %v223 = vmul.f32 %v207, 0.5
  %v224 = vmul.f32 %v208, 0.5
  %v225 = vmul.f32 %v209, 0.5
  %v226 = vmul.f32 %v210, 0.5
  %v227 = vmul.f32 %v211, 0.5
  %v228 = vmul.f32 %v212, 0.5
  %v229 = vmul.f32 %v213, 0.5
  %v230 = vmul.f32 %v214, 0.5
  %v231 = vmul.f32 %v215, 0.5
  %v232 = vmul.f32 %v216, 0.5
  %v233 = vmul.f32 %v217, 0.5
  %v234 = vmul.f32 %v218, 0.5
  %v235 = vmul.f32 %v219, 0.5
  %v236 = vmul.f32 %v220, 0.5
  %v237 = vmul.f32 %v221, 0.5
  %v238 = vmul.f32 %v222, 0.5
  %v239 = vadd.f32 %v223, 0.5
  %v240 = vadd.f32 %v224, 0.5
  %v241 = vadd.f32 %v225, 0.5
  %v242 = vadd.f32 %v226, 0.5
  %v243 = vadd.f32 %v227, 0.5
  %v244 = vadd.f32 %v228, 0.5
  %v245 = vadd.f32 %v229, 0.5
  %v246 = vadd.f32 %v230, 0.5
  %v247 = vadd.f32 %v231, 0.5
  %v248 = vadd.f32 %v232, 0.5
  %v249 = vadd.f32 %v233, 0.5
  %v250 = vadd.f32 %v234, 0.5
  %v251 = vadd.f32 %v235, 0.5
  %v252 = vadd.f32 %v236, 0.5
  %v253 = vadd.f32 %v237, 0.5
  %v254 = vadd.f32 %v238, 0.5
  %v255 = vld [vmem:[%s2] sm:$0xff]
  %v256 = vld [vmem:[%s2 + $0x8] sm:$0xff]
  %v257 = vld [vmem:[%s2 + $0x10] sm:$0xff]
  %v258 = vld [vmem:[%s2 + $0x18] sm:$0xff]
  %v259 = vunpack.c.0.s8 %v255
  %v260 = vunpack.c.1.s8 %v255
  %v261 = vunpack.c.2.s8 %v255
  %v262 = vunpack.c.3.s8 %v255
  %v263 = vunpack.c.0.s8 %v256
  %v264 = vunpack.c.1.s8 %v256
  %v265 = vunpack.c.2.s8 %v256
  %v266 = vunpack.c.3.s8 %v256
  %v267 = vunpack.c.0.s8 %v257
  %v268 = vunpack.c.1.s8 %v257
  %v269 = vunpack.c.2.s8 %v257
  %v270 = vunpack.c.3.s8 %v257
  %v271 = vunpack.c.0.s8 %v258
  %v272 = vunpack.c.1.s8 %v258
  %v273 = vunpack.c.2.s8 %v258
  %v274 = vunpack.c.3.s8 %v258
  %v275 = vcvt.s32.f32 %v259
  %v276 = vcvt.s32.f32 %v260
  %v277 = vcvt.s32.f32 %v261
  %v278 = vcvt.s32.f32 %v262
  %v279 = vcvt.s32.f32 %v263
  %v280 = vcvt.s32.f32 %v264
  %v281 = vcvt.s32.f32 %v265
  %v282 = vcvt.s32.f32 %v266
  %v283 = vcvt.s32.f32 %v267
  %v284 = vcvt.s32.f32 %v268
  %v285 = vcvt.s32.f32 %v269
  %v286 = vcvt.s32.f32 %v270
  %v287 = vcvt.s32.f32 %v271
  %v288 = vcvt.s32.f32 %v272
  %v289 = vcvt.s32.f32 %v273
  %v290 = vcvt.s32.f32 %v274
  %v291 = vmul.f32 %v239, %v275
  %v292 = vmul.f32 %v240, %v276
  %v293 = vmul.f32 %v241, %v277
  %v294 = vmul.f32 %v242, %v278
  %v295 = vmul.f32 %v243, %v279
  %v296 = vmul.f32 %v244, %v280
  %v297 = vmul.f32 %v245, %v281
  %v298 = vmul.f32 %v246, %v282
  %v299 = vmul.f32 %v247, %v283
  %v300 = vmul.f32 %v248, %v284
  %v301 = vmul.f32 %v249, %v285
  %v302 = vmul.f32 %v250, %v286
  %v303 = vmul.f32 %v251, %v287
  %v304 = vmul.f32 %v252, %v288
  %v305 = vmul.f32 %v253, %v289
  %v306 = vmul.f32 %v254, %v290
  %307 = vst [vmem:[%s3] sm:$0xff] %v291
  %308 = vst [vmem:[%s3 + $0x8] sm:$0xff] %v292
  %309 = vst [vmem:[%s3 + $0x10] sm:$0xff] %v293
  %310 = vst [vmem:[%s3 + $0x18] sm:$0xff] %v294
  %311 = vst [vmem:[%s3 + $0x20] sm:$0xff] %v295
  %312 = vst [vmem:[%s3 + $0x28] sm:$0xff] %v296
  %313 = vst [vmem:[%s3 + $0x30] sm:$0xff] %v297
  %314 = vst [vmem:[%s3 + $0x38] sm:$0xff] %v298
  %315 = vst [vmem:[%s3 + $0x40] sm:$0xff] %v299
  %316 = vst [vmem:[%s3 + $0x48] sm:$0xff] %v300
  %317 = vst [vmem:[%s3 + $0x50] sm:$0xff] %v301
  %318 = vst [vmem:[%s3 + $0x58] sm:$0xff] %v302
  %319 = vst [vmem:[%s3 + $0x60] sm:$0xff] %v303
  %320 = vst [vmem:[%s3 + $0x68] sm:$0xff] %v304
  %321 = vst [vmem:[%s3 + $0x70] sm:$0xff] %v305
  %322 = vst [vmem:[%s3 + $0x78] sm:$0xff] %v306
  // Predicated region
  $region14: #{gae_forward.5} parent=0 // pred_check
    _
  $region15: #{gae_forward.5} parent=0 // pred_check_branch
    %324 = sbr.rel (0) target = $region17
  $region16: #{gae_forward.5} parent=0 // pred_region
    _
  $region17: #{gae_forward.5} parent=0 // pred_fallthru
    _
  // Predicated region
  $region18: #{gae_forward.5} parent=0 // pred_check
    _
  $region19: #{gae_forward.5} parent=0 // pred_check_branch
    %326 = sbr.rel (0) target = $region21
  $region20: #{gae_forward.5} parent=0 // pred_region
    _
  $region21: #{gae_forward.5} parent=0 // pred_fallthru
    _

// kernel: gae_forward.4
$region0: #{gae_forward.4}
  #allocation0 [shape = 'u32[]', space=smem, size = 0x4, offset = 0x4, fixed_abs, tag = 'smem constant byte address 0x4 - core index']
  #allocation1 [shape = 'u32[72,128]{1,0:T(1,128)}', space=vmem, size = 0x9000, scoped, tag = 'internal scratch']
  #allocation2 [shape = 'f32[128,128]{1,0:T(8,128)}', space=vmem, size = 0x10000, scoped, tag = 'scratch operand']
  %s0 = inlined_call_operand.vmem [shape: bf16[128,128], index: 0, kind: input, shape index: {}]
  %s1 = inlined_call_operand.vmem [shape: bf16[128,128], index: 1, kind: input, shape index: {}]
  %s2 = inlined_call_operand.vmem [shape: f32[128,1], index: 2, kind: input, shape index: {}]
  %s3 = inlined_call_operand.vmem [shape: f32[1,128], index: 3, kind: input, shape index: {}]
  %s4 = inlined_call_operand.vmem [shape: bf16[128,128], index: 4, kind: output, shape index: {}]
  %s5 = sld [smem:[#allocation0]]
  $region34: #{gae_forward.4} parent=0
    _
  %s7 = ssub.s32 1, %s5
  %s8 = scalar_select 0, %s7, %s5
  // Predicated region
  $region2: #{gae_forward.4} parent=0 // pred_check
    _
  $region3: #{gae_forward.4} parent=0 // pred_check_branch
    %10 = sbr.rel (0) target = $region5
  $region4: #{gae_forward.4} parent=0 // pred_region
    _
  $region5: #{gae_forward.4} parent=0 // pred_fallthru
    _
  // Predicated region
  $region6: #{gae_forward.4} parent=0 // pred_check
    _
  $region7: #{gae_forward.4} parent=0 // pred_check_branch
    %12 = sbr.rel (0) target = $region9
  $region8: #{gae_forward.4} parent=0 // pred_region
    _
  $region9: #{gae_forward.4} parent=0 // pred_fallthru
    _
  // Predicated region
  $region10: #{gae_forward.4} parent=0 // pred_check
    _
  $region11: #{gae_forward.4} parent=0 // pred_check_branch
    %14 = sbr.rel (0) target = $region13
  $region12: #{gae_forward.4} parent=0 // pred_region
    _
  $region13: #{gae_forward.4} parent=0 // pred_fallthru
    _
  // Predicated region
  $region14: #{gae_forward.4} parent=0 // pred_check
    _
  $region15: #{gae_forward.4} parent=0 // pred_check_branch
    %16 = sbr.rel (0) target = $region17
  $region16: #{gae_forward.4} parent=0 // pred_region
    _
  $region17: #{gae_forward.4} parent=0 // pred_fallthru
    _
  %p17 = scmp.eq.s32.totalorder 0, 0
  // Predicated region
  $region18: #{gae_forward.4} parent=0 // pred_check
    %p18 = pneg %p17
  $region19: #{gae_forward.4} parent=0 // pred_check_branch
    %20 = sbr.rel (%p18) target = $region21
  $region20: #{gae_forward.4} parent=0 // pred_region
    %21 = vst [vmem:[#allocation2] sm:$0xff] 0.0
    %22 = vst [vmem:[#allocation2 + $0x8] sm:$0xff] 0.0
    %23 = vst [vmem:[#allocation2 + $0x10] sm:$0xff] 0.0
    %24 = vst [vmem:[#allocation2 + $0x18] sm:$0xff] 0.0
    %25 = vst [vmem:[#allocation2 + $0x20] sm:$0xff] 0.0
    %26 = vst [vmem:[#allocation2 + $0x28] sm:$0xff] 0.0
    %27 = vst [vmem:[#allocation2 + $0x30] sm:$0xff] 0.0
    %28 = vst [vmem:[#allocation2 + $0x38] sm:$0xff] 0.0
    %29 = vst [vmem:[#allocation2 + $0x40] sm:$0xff] 0.0
    %30 = vst [vmem:[#allocation2 + $0x48] sm:$0xff] 0.0
    %31 = vst [vmem:[#allocation2 + $0x50] sm:$0xff] 0.0
    %32 = vst [vmem:[#allocation2 + $0x58] sm:$0xff] 0.0
    %33 = vst [vmem:[#allocation2 + $0x60] sm:$0xff] 0.0
    %34 = vst [vmem:[#allocation2 + $0x68] sm:$0xff] 0.0
    %35 = vst [vmem:[#allocation2 + $0x70] sm:$0xff] 0.0
    %36 = vst [vmem:[#allocation2 + $0x78] sm:$0xff] 0.0
  $region21: #{gae_forward.4} parent=0 // pred_fallthru
    _
  %v37 = vld [vmem:[#allocation2] sm:$0xff]
  %v38 = vld [vmem:[#allocation2 + $0x8] sm:$0xff]
  %v39 = vld [vmem:[#allocation2 + $0x10] sm:$0xff]
  %v40 = vld [vmem:[#allocation2 + $0x18] sm:$0xff]
  %v41 = vld [vmem:[#allocation2 + $0x20] sm:$0xff]
  %v42 = vld [vmem:[#allocation2 + $0x28] sm:$0xff]
  %v43 = vld [vmem:[#allocation2 + $0x30] sm:$0xff]
  %v44 = vld [vmem:[#allocation2 + $0x38] sm:$0xff]
  %v45 = vld [vmem:[#allocation2 + $0x40] sm:$0xff]
  %v46 = vld [vmem:[#allocation2 + $0x48] sm:$0xff]
  %v47 = vld [vmem:[#allocation2 + $0x50] sm:$0xff]
  %v48 = vld [vmem:[#allocation2 + $0x58] sm:$0xff]
  %v49 = vld [vmem:[#allocation2 + $0x60] sm:$0xff]
  %v50 = vld [vmem:[#allocation2 + $0x68] sm:$0xff]
  %v51 = vld [vmem:[#allocation2 + $0x70] sm:$0xff]
  %v52 = vld [vmem:[#allocation2 + $0x78] sm:$0xff]
  %v53 = vld [vmem:[%s0] sm:$0xf]
  %v54 = vld [vmem:[%s0 + $0x4] sm:$0xf]
  %v55 = vld [vmem:[%s0 + $0x8] sm:$0xf]
  %v56 = vld [vmem:[%s0 + $0xc] sm:$0xf]
  %v57 = vld [vmem:[%s0 + $0x10] sm:$0xf]
  %v58 = vld [vmem:[%s0 + $0x14] sm:$0xf]
  %v59 = vld [vmem:[%s0 + $0x18] sm:$0xf]
  %v60 = vld [vmem:[%s0 + $0x1c] sm:$0xf]
  %v61 = vld [vmem:[%s0 + $0x20] sm:$0xf]
  %v62 = vld [vmem:[%s0 + $0x24] sm:$0xf]
  %v63 = vld [vmem:[%s0 + $0x28] sm:$0xf]
  %v64 = vld [vmem:[%s0 + $0x2c] sm:$0xf]
  %v65 = vld [vmem:[%s0 + $0x30] sm:$0xf]
  %v66 = vld [vmem:[%s0 + $0x34] sm:$0xf]
  %v67 = vld [vmem:[%s0 + $0x38] sm:$0xf]
  %v68 = vld [vmem:[%s0 + $0x3c] sm:$0xf]
  %v69 = vld [vmem:[%s1] sm:$0xf]
  %v70 = vld [vmem:[%s1 + $0x4] sm:$0xf]
  %v71 = vld [vmem:[%s1 + $0x8] sm:$0xf]
  %v72 = vld [vmem:[%s1 + $0xc] sm:$0xf]
  %v73 = vld [vmem:[%s1 + $0x10] sm:$0xf]
  %v74 = vld [vmem:[%s1 + $0x14] sm:$0xf]
  %v75 = vld [vmem:[%s1 + $0x18] sm:$0xf]
  %v76 = vld [vmem:[%s1 + $0x1c] sm:$0xf]
  %v77 = vld [vmem:[%s1 + $0x20] sm:$0xf]
  %v78 = vld [vmem:[%s1 + $0x24] sm:$0xf]
  %v79 = vld [vmem:[%s1 + $0x28] sm:$0xf]
  %v80 = vld [vmem:[%s1 + $0x2c] sm:$0xf]
  %v81 = vld [vmem:[%s1 + $0x30] sm:$0xf]
  %v82 = vld [vmem:[%s1 + $0x34] sm:$0xf]
  %v83 = vld [vmem:[%s1 + $0x38] sm:$0xf]
  %v84 = vld [vmem:[%s1 + $0x3c] sm:$0xf]
  %v101 = vunpack.c.l.b16 %v53
  %v102 = vunpack.c.l.b16 %v54
  %v103 = vunpack.c.l.b16 %v55
  %v104 = vunpack.c.l.b16 %v56
  %v105 = vunpack.c.l.b16 %v57
  %v106 = vunpack.c.l.b16 %v58
  %v107 = vunpack.c.l.b16 %v59
  %v108 = vunpack.c.l.b16 %v60
  %v109 = vunpack.c.l.b16 %v61
  %v110 = vunpack.c.l.b16 %v62
  %v111 = vunpack.c.l.b16 %v63
  %v112 = vunpack.c.l.b16 %v64
  %v113 = vunpack.c.l.b16 %v65
  %v114 = vunpack.c.l.b16 %v66
  %v115 = vunpack.c.l.b16 %v67
  %v116 = vunpack.c.l.b16 %v68
  %v117 = vpack.c.b16 %v102, %v101
  %v118 = vpack.c.b16 %v104, %v103
  %v119 = vpack.c.b16 %v106, %v105
  %v120 = vpack.c.b16 %v108, %v107
  %v121 = vpack.c.b16 %v110, %v109
  %v122 = vpack.c.b16 %v112, %v111
  %v123 = vpack.c.b16 %v114, %v113
  %v124 = vpack.c.b16 %v116, %v115
  %v149 = vunpack.c.l.b16 %v69
  %v150 = vunpack.c.l.b16 %v70
  %v151 = vunpack.c.l.b16 %v71
  %v152 = vunpack.c.l.b16 %v72
  %v153 = vunpack.c.l.b16 %v73
  %v154 = vunpack.c.l.b16 %v74
  %v155 = vunpack.c.l.b16 %v75
  %v156 = vunpack.c.l.b16 %v76
  %v157 = vunpack.c.l.b16 %v77
  %v158 = vunpack.c.l.b16 %v78
  %v159 = vunpack.c.l.b16 %v79
  %v160 = vunpack.c.l.b16 %v80
  %v161 = vunpack.c.l.b16 %v81
  %v162 = vunpack.c.l.b16 %v82
  %v163 = vunpack.c.l.b16 %v83
  %v164 = vunpack.c.l.b16 %v84
  %v165 = vpack.c.b16 %v150, %v149
  %v166 = vpack.c.b16 %v152, %v151
  %v167 = vpack.c.b16 %v154, %v153
  %v168 = vpack.c.b16 %v156, %v155
  %v169 = vpack.c.b16 %v158, %v157
  %v170 = vpack.c.b16 %v160, %v159
  %v171 = vpack.c.b16 %v162, %v161
  %v172 = vpack.c.b16 %v164, %v163
  %181 = vmatpush.bf16.msra.mxu0 %v172
  %182 = vmatpush.bf16.msra.mxu0 %v171
  %183 = vmatpush.bf16.msra.mxu0 %v170
  %184 = vmatpush.bf16.msra.mxu0 %v169
  %185 = vmatpush.bf16.msra.mxu0 %v168
  %186 = vmatpush.bf16.msra.mxu0 %v167
  %187 = vmatpush.bf16.msra.mxu0 %v166
  %188 = vmatpush.bf16.msra.mxu0 %v165
  %189 = vmatmul.bf16.gmra.mxu0 %v117
  %v190 = vpop.f32.mrf.mxu0
  %v191 = vadd.f32 0.0, %v190
  %v192 = vpop.f32.mrf.mxu0
  %v193 = vadd.f32 0.0, %v192
  %194 = vmatmul.bf16.gmra.mxu0 %v118
  %v195 = vpop.f32.mrf.mxu0
  %v196 = vadd.f32 0.0, %v195
  %v197 = vpop.f32.mrf.mxu0
  %v198 = vadd.f32 0.0, %v197
  %199 = vmatmul.bf16.gmra.mxu0 %v119
  %v200 = vpop.f32.mrf.mxu0
  %v201 = vadd.f32 0.0, %v200
  %v202 = vpop.f32.mrf.mxu0
  %v203 = vadd.f32 0.0, %v202
  %204 = vmatmul.bf16.gmra.mxu0 %v120
  %v205 = vpop.f32.mrf.mxu0
  %v206 = vadd.f32 0.0, %v205
  %v207 = vpop.f32.mrf.mxu0
  %v208 = vadd.f32 0.0, %v207
  %209 = vmatmul.bf16.gmra.mxu0 %v121
  %v210 = vpop.f32.mrf.mxu0
  %v211 = vadd.f32 0.0, %v210
  %v212 = vpop.f32.mrf.mxu0
  %v213 = vadd.f32 0.0, %v212
  %214 = vmatmul.bf16.gmra.mxu0 %v122
  %v215 = vpop.f32.mrf.mxu0
  %v216 = vadd.f32 0.0, %v215
  %v217 = vpop.f32.mrf.mxu0
  %v218 = vadd.f32 0.0, %v217
  %219 = vmatmul.bf16.gmra.mxu0 %v123
  %v220 = vpop.f32.mrf.mxu0
  %v221 = vadd.f32 0.0, %v220
  %v222 = vpop.f32.mrf.mxu0
  %v223 = vadd.f32 0.0, %v222
  %224 = vmatmul.bf16.gmra.mxu0 %v124
  %v225 = vpop.f32.mrf.mxu0
  %v226 = vadd.f32 0.0, %v225
  %v227 = vpop.f32.mrf.mxu0
  %v228 = vadd.f32 0.0, %v227
  %229 = vdwg.mxu0
  %v230 = vadd.f32 %v37, %v191
  %v231 = vadd.f32 %v38, %v193
  %v232 = vadd.f32 %v39, %v196
  %v233 = vadd.f32 %v40, %v198
  %v234 = vadd.f32 %v41, %v201
  %v235 = vadd.f32 %v42, %v203
  %v236 = vadd.f32 %v43, %v206
  %v237 = vadd.f32 %v44, %v208
  %v238 = vadd.f32 %v45, %v211
  %v239 = vadd.f32 %v46, %v213
  %v240 = vadd.f32 %v47, %v216
  %v241 = vadd.f32 %v48, %v218
  %v242 = vadd.f32 %v49, %v221
  %v243 = vadd.f32 %v50, %v223
  %v244 = vadd.f32 %v51, %v226
  %v245 = vadd.f32 %v52, %v228
  %246 = vst [vmem:[#allocation2] sm:$0xff] %v230
  %247 = vst [vmem:[#allocation2 + $0x8] sm:$0xff] %v231
  %248 = vst [vmem:[#allocation2 + $0x10] sm:$0xff] %v232
  %249 = vst [vmem:[#allocation2 + $0x18] sm:$0xff] %v233
  %250 = vst [vmem:[#allocation2 + $0x20] sm:$0xff] %v234
  %251 = vst [vmem:[#allocation2 + $0x28] sm:$0xff] %v235
  %252 = vst [vmem:[#allocation2 + $0x30] sm:$0xff] %v236
  %253 = vst [vmem:[#allocation2 + $0x38] sm:$0xff] %v237
  %254 = vst [vmem:[#allocation2 + $0x40] sm:$0xff] %v238
  %255 = vst [vmem:[#allocation2 + $0x48] sm:$0xff] %v239
  %256 = vst [vmem:[#allocation2 + $0x50] sm:$0xff] %v240
  %257 = vst [vmem:[#allocation2 + $0x58] sm:$0xff] %v241
  %258 = vst [vmem:[#allocation2 + $0x60] sm:$0xff] %v242
  %259 = vst [vmem:[#allocation2 + $0x68] sm:$0xff] %v243
  %260 = vst [vmem:[#allocation2 + $0x70] sm:$0xff] %v244
  %261 = vst [vmem:[#allocation2 + $0x78] sm:$0xff] %v245
  // Predicated region
  $region22: #{gae_forward.4} parent=0 // pred_check
    %p262 = pneg %p17
  $region23: #{gae_forward.4} parent=0 // pred_check_branch
    %264 = sbr.rel (%p262) target = $region25
  $region24: #{gae_forward.4} parent=0 // pred_region
    %v265 = vld [vmem:[#allocation2] sm:$0xff]
    %v266 = vld [vmem:[#allocation2 + $0x8] sm:$0xff]
    %v267 = vld [vmem:[#allocation2 + $0x10] sm:$0xff]
    %v268 = vld [vmem:[#allocation2 + $0x18] sm:$0xff]
    %v269 = vld [vmem:[#allocation2 + $0x20] sm:$0xff]
    %v270 = vld [vmem:[#allocation2 + $0x28] sm:$0xff]
    %v271 = vld [vmem:[#allocation2 + $0x30] sm:$0xff]
    %v272 = vld [vmem:[#allocation2 + $0x38] sm:$0xff]
    %v273 = vld [vmem:[#allocation2 + $0x40] sm:$0xff]
    %v274 = vld [vmem:[#allocation2 + $0x48] sm:$0xff]
    %v275 = vld [vmem:[#allocation2 + $0x50] sm:$0xff]
    %v276 = vld [vmem:[#allocation2 + $0x58] sm:$0xff]
    %v277 = vld [vmem:[#allocation2 + $0x60] sm:$0xff]
    %v278 = vld [vmem:[#allocation2 + $0x68] sm:$0xff]
    %v279 = vld [vmem:[#allocation2 + $0x70] sm:$0xff]
    %v280 = vld [vmem:[#allocation2 + $0x78] sm:$0xff]
    %v281 = vld [vmem:[%s2] sm:$0xff]
    %v282 = vld [vmem:[%s2 + $0x8] sm:$0xff]
    %v283 = vld [vmem:[%s2 + $0x10] sm:$0xff]
    %v284 = vld [vmem:[%s2 + $0x18] sm:$0xff]
    %v285 = vld [vmem:[%s2 + $0x20] sm:$0xff]
    %v286 = vld [vmem:[%s2 + $0x28] sm:$0xff]
    %v287 = vld [vmem:[%s2 + $0x30] sm:$0xff]
    %v288 = vld [vmem:[%s2 + $0x38] sm:$0xff]
    %v289 = vld [vmem:[%s2 + $0x40] sm:$0xff]
    %v290 = vld [vmem:[%s2 + $0x48] sm:$0xff]
    %v291 = vld [vmem:[%s2 + $0x50] sm:$0xff]
    %v292 = vld [vmem:[%s2 + $0x58] sm:$0xff]
    %v293 = vld [vmem:[%s2 + $0x60] sm:$0xff]
    %v294 = vld [vmem:[%s2 + $0x68] sm:$0xff]
    %v295 = vld [vmem:[%s2 + $0x70] sm:$0xff]
    %v296 = vld [vmem:[%s2 + $0x78] sm:$0xff]
    %298 = vset.pattern.permute.xlu0 0
    %299 = vperm.xlu0 %298, %v281
    %v300 = vpop.permute.xlu0 %299
    %303 = vset.pattern.permute.xlu0 0
    %304 = vperm.xlu0 %303, %v282
    %v305 = vpop.permute.xlu0 %304
    %308 = vset.pattern.permute.xlu0 0
    %309 = vperm.xlu0 %308, %v283
    %v310 = vpop.permute.xlu0 %309
    %313 = vset.pattern.permute.xlu0 0
    %314 = vperm.xlu0 %313, %v284
    %v315 = vpop.permute.xlu0 %314
    %318 = vset.pattern.permute.xlu0 0
    %319 = vperm.xlu0 %318, %v285
    %v320 = vpop.permute.xlu0 %319
    %323 = vset.pattern.permute.xlu0 0
    %324 = vperm.xlu0 %323, %v286
    %v325 = vpop.permute.xlu0 %324
    %328 = vset.pattern.permute.xlu0 0
    %329 = vperm.xlu0 %328, %v287
    %v330 = vpop.permute.xlu0 %329
    %333 = vset.pattern.permute.xlu0 0
    %334 = vperm.xlu0 %333, %v288
    %v335 = vpop.permute.xlu0 %334
    %338 = vset.pattern.permute.xlu0 0
    %339 = vperm.xlu0 %338, %v289
    %v340 = vpop.permute.xlu0 %339
    %343 = vset.pattern.permute.xlu0 0
    %344 = vperm.xlu0 %343, %v290
    %v345 = vpop.permute.xlu0 %344
    %348 = vset.pattern.permute.xlu0 0
    %349 = vperm.xlu0 %348, %v291
    %v350 = vpop.permute.xlu0 %349
    %353 = vset.pattern.permute.xlu0 0
    %354 = vperm.xlu0 %353, %v292
    %v355 = vpop.permute.xlu0 %354
    %358 = vset.pattern.permute.xlu0 0
    %359 = vperm.xlu0 %358, %v293
    %v360 = vpop.permute.xlu0 %359
    %363 = vset.pattern.permute.xlu0 0
    %364 = vperm.xlu0 %363, %v294
    %v365 = vpop.permute.xlu0 %364
    %368 = vset.pattern.permute.xlu0 0
    %369 = vperm.xlu0 %368, %v295
    %v370 = vpop.permute.xlu0 %369
    %373 = vset.pattern.permute.xlu0 0
    %374 = vperm.xlu0 %373, %v296
    %v375 = vpop.permute.xlu0 %374
    %v377 = vmul.f32 %v265, %v300
    %v378 = vmul.f32 %v266, %v305
    %v379 = vmul.f32 %v267, %v310
    %v380 = vmul.f32 %v268, %v315
    %v381 = vmul.f32 %v269, %v320
    %v382 = vmul.f32 %v270, %v325
    %v383 = vmul.f32 %v271, %v330
    %v384 = vmul.f32 %v272, %v335
    %v385 = vmul.f32 %v273, %v340
    %v386 = vmul.f32 %v274, %v345
    %v387 = vmul.f32 %v275, %v350
    %v388 = vmul.f32 %v276, %v355
    %v389 = vmul.f32 %v277, %v360
    %v390 = vmul.f32 %v278, %v365
    %v391 = vmul.f32 %v279, %v370
    %v392 = vmul.f32 %v280, %v375
    %v393 = vld [vmem:[%s3] sm:$0x1]
    %v395 = vperm.slane %v393, 0
    %v397 = vadd.f32 %v377, %v395
    %v398 = vadd.f32 %v378, %v395
    %v399 = vadd.f32 %v379, %v395
    %v400 = vadd.f32 %v380, %v395
    %v401 = vadd.f32 %v381, %v395
    %v402 = vadd.f32 %v382, %v395
    %v403 = vadd.f32 %v383, %v395
    %v404 = vadd.f32 %v384, %v395
    %v405 = vadd.f32 %v385, %v395
    %v406 = vadd.f32 %v386, %v395
    %v407 = vadd.f32 %v387, %v395
    %v408 = vadd.f32 %v388, %v395
    %v409 = vadd.f32 %v389, %v395
    %v410 = vadd.f32 %v390, %v395
    %v411 = vadd.f32 %v391, %v395
    %v412 = vadd.f32 %v392, %v395
    %v413 = vpack.c.bf16 %v397, %v397
    %v414 = vpack.c.bf16 %v398, %v398
    %v415 = vpack.c.bf16 %v399, %v399
    %v416 = vpack.c.bf16 %v400, %v400
    %v417 = vpack.c.bf16 %v401, %v401
    %v418 = vpack.c.bf16 %v402, %v402
    %v419 = vpack.c.bf16 %v403, %v403
    %v420 = vpack.c.bf16 %v404, %v404
    %v421 = vpack.c.bf16 %v405, %v405
    %v422 = vpack.c.bf16 %v406, %v406
    %v423 = vpack.c.bf16 %v407, %v407
    %v424 = vpack.c.bf16 %v408, %v408
    %v425 = vpack.c.bf16 %v409, %v409
    %v426 = vpack.c.bf16 %v410, %v410
    %v427 = vpack.c.bf16 %v411, %v411
    %v428 = vpack.c.bf16 %v412, %v412
    %429 = vst [vmem:[%s4] sm:$0xf] %v413
    %430 = vst [vmem:[%s4 + $0x4] sm:$0xf] %v414
    %431 = vst [vmem:[%s4 + $0x8] sm:$0xf] %v415
    %432 = vst [vmem:[%s4 + $0xc] sm:$0xf] %v416
    %433 = vst [vmem:[%s4 + $0x10] sm:$0xf] %v417
    %434 = vst [vmem:[%s4 + $0x14] sm:$0xf] %v418
    %435 = vst [vmem:[%s4 + $0x18] sm:$0xf] %v419
    %436 = vst [vmem:[%s4 + $0x1c] sm:$0xf] %v420
    %437 = vst [vmem:[%s4 + $0x20] sm:$0xf] %v421
    %438 = vst [vmem:[%s4 + $0x24] sm:$0xf] %v422
    %439 = vst [vmem:[%s4 + $0x28] sm:$0xf] %v423
    %440 = vst [vmem:[%s4 + $0x2c] sm:$0xf] %v424
    %441 = vst [vmem:[%s4 + $0x30] sm:$0xf] %v425
    %442 = vst [vmem:[%s4 + $0x34] sm:$0xf] %v426
    %443 = vst [vmem:[%s4 + $0x38] sm:$0xf] %v427
    %444 = vst [vmem:[%s4 + $0x3c] sm:$0xf] %v428
  $region25: #{gae_forward.4} parent=0 // pred_fallthru
    _
  // Predicated region
  $region26: #{gae_forward.4} parent=0 // pred_check
    _
  $region27: #{gae_forward.4} parent=0 // pred_check_branch
    %446 = sbr.rel (0) target = $region29
  $region28: #{gae_forward.4} parent=0 // pred_region
    _
  $region29: #{gae_forward.4} parent=0 // pred_fallthru
    _
  // Predicated region
  $region30: #{gae_forward.4} parent=0 // pred_check
    _
  $region31: #{gae_forward.4} parent=0 // pred_check_branch
    %448 = sbr.rel (0) target = $region33
  $region32: #{gae_forward.4} parent=0 // pred_region
    _
  $region33: #{gae_forward.4} parent=0 // pred_fallthru
    _

// kernel: gae_forward.3
$region0: #{gae_forward.3}
  #allocation0 [shape = 'u32[]', space=smem, size = 0x4, offset = 0x4, fixed_abs, tag = 'smem constant byte address 0x4 - core index']
  #allocation1 [shape = 'u32[72,128]{1,0:T(1,128)}', space=vmem, size = 0x9000, scoped, tag = 'internal scratch']
  #allocation2 [shape = 'f32[128,8]{1,0:T(8,128)}', space=vmem, size = 0x10000, scoped, tag = 'scratch operand']
  %s0 = inlined_call_operand.vmem [shape: bf16[128,128], index: 0, kind: input, shape index: {}]
  %s1 = inlined_call_operand.vmem [shape: bf16[128,8], index: 1, kind: input, shape index: {}]
  %s2 = inlined_call_operand.vmem [shape: f32[128,1], index: 2, kind: input, shape index: {}]
  %s3 = inlined_call_operand.vmem [shape: f32[8,32], index: 3, kind: input, shape index: {}]
  %s4 = inlined_call_operand.vmem [shape: f32[1,32], index: 4, kind: input, shape index: {}]
  %s5 = inlined_call_operand.vmem [shape: f32[32,128], index: 5, kind: input, shape index: {}]
  %s6 = inlined_call_operand.vmem [shape: bf16[128,128], index: 6, kind: output, shape index: {}]
  %s7 = sld [smem:[#allocation0]]
  $region42: #{gae_forward.3} parent=0
    _
  %s9 = ssub.s32 1, %s7
  %s10 = scalar_select 0, %s9, %s7
  // Predicated region
  $region2: #{gae_forward.3} parent=0 // pred_check
    _
  $region3: #{gae_forward.3} parent=0 // pred_check_branch
    %12 = sbr.rel (0) target = $region5
  $region4: #{gae_forward.3} parent=0 // pred_region
    _
  $region5: #{gae_forward.3} parent=0 // pred_fallthru
    _
  // Predicated region
  $region6: #{gae_forward.3} parent=0 // pred_check
    _
  $region7: #{gae_forward.3} parent=0 // pred_check_branch
    %14 = sbr.rel (0) target = $region9
  $region8: #{gae_forward.3} parent=0 // pred_region
    _
  $region9: #{gae_forward.3} parent=0 // pred_fallthru
    _
  // Predicated region
  $region10: #{gae_forward.3} parent=0 // pred_check
    _
  $region11: #{gae_forward.3} parent=0 // pred_check_branch
    %16 = sbr.rel (0) target = $region13
  $region12: #{gae_forward.3} parent=0 // pred_region
    _
  $region13: #{gae_forward.3} parent=0 // pred_fallthru
    _
  // Predicated region
  $region14: #{gae_forward.3} parent=0 // pred_check
    _
  $region15: #{gae_forward.3} parent=0 // pred_check_branch
    %18 = sbr.rel (0) target = $region17
  $region16: #{gae_forward.3} parent=0 // pred_region
    _
  $region17: #{gae_forward.3} parent=0 // pred_fallthru
    _
  // Predicated region
  $region18: #{gae_forward.3} parent=0 // pred_check
    _
  $region19: #{gae_forward.3} parent=0 // pred_check_branch
    %20 = sbr.rel (0) target = $region21
  $region20: #{gae_forward.3} parent=0 // pred_region
    _
  $region21: #{gae_forward.3} parent=0 // pred_fallthru
    _
  // Predicated region
  $region22: #{gae_forward.3} parent=0 // pred_check
    _
  $region23: #{gae_forward.3} parent=0 // pred_check_branch
    %22 = sbr.rel (0) target = $region25
  $region24: #{gae_forward.3} parent=0 // pred_region
    _
  $region25: #{gae_forward.3} parent=0 // pred_fallthru
    _
  %p23 = scmp.eq.s32.totalorder 0, 0
  // Predicated region
  $region26: #{gae_forward.3} parent=0 // pred_check
    %p24 = pneg %p23
  $region27: #{gae_forward.3} parent=0 // pred_check_branch
    %26 = sbr.rel (%p24) target = $region29
  $region28: #{gae_forward.3} parent=0 // pred_region
    %vm27 = vcmask 64512
    %28 = vst.msk [vmem:[#allocation2] sm:$0xff] %vm27, 0.0
    %29 = vst.msk [vmem:[#allocation2 + $0x8] sm:$0xff] %vm27, 0.0
    %30 = vst.msk [vmem:[#allocation2 + $0x10] sm:$0xff] %vm27, 0.0
    %31 = vst.msk [vmem:[#allocation2 + $0x18] sm:$0xff] %vm27, 0.0
    %32 = vst.msk [vmem:[#allocation2 + $0x20] sm:$0xff] %vm27, 0.0
    %33 = vst.msk [vmem:[#allocation2 + $0x28] sm:$0xff] %vm27, 0.0
    %34 = vst.msk [vmem:[#allocation2 + $0x30] sm:$0xff] %vm27, 0.0
    %35 = vst.msk [vmem:[#allocation2 + $0x38] sm:$0xff] %vm27, 0.0
    %36 = vst.msk [vmem:[#allocation2 + $0x40] sm:$0xff] %vm27, 0.0
    %37 = vst.msk [vmem:[#allocation2 + $0x48] sm:$0xff] %vm27, 0.0
    %38 = vst.msk [vmem:[#allocation2 + $0x50] sm:$0xff] %vm27, 0.0
    %39 = vst.msk [vmem:[#allocation2 + $0x58] sm:$0xff] %vm27, 0.0
    %40 = vst.msk [vmem:[#allocation2 + $0x60] sm:$0xff] %vm27, 0.0
    %41 = vst.msk [vmem:[#allocation2 + $0x68] sm:$0xff] %vm27, 0.0
    %42 = vst.msk [vmem:[#allocation2 + $0x70] sm:$0xff] %vm27, 0.0
    %43 = vst.msk [vmem:[#allocation2 + $0x78] sm:$0xff] %vm27, 0.0
  $region29: #{gae_forward.3} parent=0 // pred_fallthru
    _
  %v44 = vld [vmem:[#allocation2] sm:$0xff]
  %v45 = vld [vmem:[#allocation2 + $0x8] sm:$0xff]
  %v46 = vld [vmem:[#allocation2 + $0x10] sm:$0xff]
  %v47 = vld [vmem:[#allocation2 + $0x18] sm:$0xff]
  %v48 = vld [vmem:[#allocation2 + $0x20] sm:$0xff]
  %v49 = vld [vmem:[#allocation2 + $0x28] sm:$0xff]
  %v50 = vld [vmem:[#allocation2 + $0x30] sm:$0xff]
  %v51 = vld [vmem:[#allocation2 + $0x38] sm:$0xff]
  %v52 = vld [vmem:[#allocation2 + $0x40] sm:$0xff]
  %v53 = vld [vmem:[#allocation2 + $0x48] sm:$0xff]
  %v54 = vld [vmem:[#allocation2 + $0x50] sm:$0xff]
  %v55 = vld [vmem:[#allocation2 + $0x58] sm:$0xff]
  %v56 = vld [vmem:[#allocation2 + $0x60] sm:$0xff]
  %v57 = vld [vmem:[#allocation2 + $0x68] sm:$0xff]
  %v58 = vld [vmem:[#allocation2 + $0x70] sm:$0xff]
  %v59 = vld [vmem:[#allocation2 + $0x78] sm:$0xff]
  %v60 = vld [vmem:[%s0] sm:$0xf]
  %v61 = vld [vmem:[%s0 + $0x4] sm:$0xf]
  %v62 = vld [vmem:[%s0 + $0x8] sm:$0xf]
  %v63 = vld [vmem:[%s0 + $0xc] sm:$0xf]
  %v64 = vld [vmem:[%s0 + $0x10] sm:$0xf]
  %v65 = vld [vmem:[%s0 + $0x14] sm:$0xf]
  %v66 = vld [vmem:[%s0 + $0x18] sm:$0xf]
  %v67 = vld [vmem:[%s0 + $0x1c] sm:$0xf]
  %v68 = vld [vmem:[%s0 + $0x20] sm:$0xf]
  %v69 = vld [vmem:[%s0 + $0x24] sm:$0xf]
  %v70 = vld [vmem:[%s0 + $0x28] sm:$0xf]
  %v71 = vld [vmem:[%s0 + $0x2c] sm:$0xf]
  %v72 = vld [vmem:[%s0 + $0x30] sm:$0xf]
  %v73 = vld [vmem:[%s0 + $0x34] sm:$0xf]
  %v74 = vld [vmem:[%s0 + $0x38] sm:$0xf]
  %v75 = vld [vmem:[%s0 + $0x3c] sm:$0xf]
  %v76 = vld [vmem:[%s1] sm:$0xf]
  %v77 = vld [vmem:[%s1 + $0x4] sm:$0xf]
  %v78 = vld [vmem:[%s1 + $0x8] sm:$0xf]
  %v79 = vld [vmem:[%s1 + $0xc] sm:$0xf]
  %v80 = vld [vmem:[%s1 + $0x10] sm:$0xf]
  %v81 = vld [vmem:[%s1 + $0x14] sm:$0xf]
  %v82 = vld [vmem:[%s1 + $0x18] sm:$0xf]
  %v83 = vld [vmem:[%s1 + $0x1c] sm:$0xf]
  %v84 = vld [vmem:[%s1 + $0x20] sm:$0xf]
  %v85 = vld [vmem:[%s1 + $0x24] sm:$0xf]
  %v86 = vld [vmem:[%s1 + $0x28] sm:$0xf]
  %v87 = vld [vmem:[%s1 + $0x2c] sm:$0xf]
  %v88 = vld [vmem:[%s1 + $0x30] sm:$0xf]
  %v89 = vld [vmem:[%s1 + $0x34] sm:$0xf]
  %v90 = vld [vmem:[%s1 + $0x38] sm:$0xf]
  %v91 = vld [vmem:[%s1 + $0x3c] sm:$0xf]
  %v108 = vunpack.c.l.b16 %v60
  %v109 = vunpack.c.l.b16 %v61
  %v110 = vunpack.c.l.b16 %v62
  %v111 = vunpack.c.l.b16 %v63
  %v112 = vunpack.c.l.b16 %v64
  %v113 = vunpack.c.l.b16 %v65
  %v114 = vunpack.c.l.b16 %v66
  %v115 = vunpack.c.l.b16 %v67
  %v116 = vunpack.c.l.b16 %v68
  %v117 = vunpack.c.l.b16 %v69
  %v118 = vunpack.c.l.b16 %v70
  %v119 = vunpack.c.l.b16 %v71
  %v120 = vunpack.c.l.b16 %v72
  %v121 = vunpack.c.l.b16 %v73
  %v122 = vunpack.c.l.b16 %v74
  %v123 = vunpack.c.l.b16 %v75
  %v124 = vpack.c.b16 %v109, %v108
  %v125 = vpack.c.b16 %v111, %v110
  %v126 = vpack.c.b16 %v113, %v112
  %v127 = vpack.c.b16 %v115, %v114
  %v128 = vpack.c.b16 %v117, %v116
  %v129 = vpack.c.b16 %v119, %v118
  %v130 = vpack.c.b16 %v121, %v120
  %v131 = vpack.c.b16 %v123, %v122
  %v156 = vunpack.c.l.b16 %v76
  %v157 = vunpack.c.l.b16 %v77
  %v158 = vunpack.c.l.b16 %v78
  %v159 = vunpack.c.l.b16 %v79
  %v160 = vunpack.c.l.b16 %v80
  %v161 = vunpack.c.l.b16 %v81
  %v162 = vunpack.c.l.b16 %v82
  %v163 = vunpack.c.l.b16 %v83
  %v164 = vunpack.c.l.b16 %v84
  %v165 = vunpack.c.l.b16 %v85
  %v166 = vunpack.c.l.b16 %v86
  %v167 = vunpack.c.l.b16 %v87
  %v168 = vunpack.c.l.b16 %v88
  %v169 = vunpack.c.l.b16 %v89
  %v170 = vunpack.c.l.b16 %v90
  %v171 = vunpack.c.l.b16 %v91
  %v172 = vpack.c.b16 %v157, %v156
  %v173 = vpack.c.b16 %v159, %v158
  %v174 = vpack.c.b16 %v161, %v160
  %v175 = vpack.c.b16 %v163, %v162
  %v176 = vpack.c.b16 %v165, %v164
  %v177 = vpack.c.b16 %v167, %v166
  %v178 = vpack.c.b16 %v169, %v168
  %v179 = vpack.c.b16 %v171, %v170
  %188 = vmatpush.bf16.msra.mxu0 %v179
  %189 = vmatpush.bf16.msra.mxu0 %v178
  %190 = vmatpush.bf16.msra.mxu0 %v177
  %191 = vmatpush.bf16.msra.mxu0 %v176
  %192 = vmatpush.bf16.msra.mxu0 %v175
  %193 = vmatpush.bf16.msra.mxu0 %v174
  %194 = vmatpush.bf16.msra.mxu0 %v173
  %195 = vmatpush.bf16.msra.mxu0 %v172
  %196 = vmatmul.bf16.gmra.mxu0 %v124
  %v197 = vpop.f32.mrf.mxu0
  %v198 = vadd.f32 0.0, %v197
  %v199 = vpop.f32.mrf.mxu0
  %v200 = vadd.f32 0.0, %v199
  %201 = vmatmul.bf16.gmra.mxu0 %v125
  %v202 = vpop.f32.mrf.mxu0
  %v203 = vadd.f32 0.0, %v202
  %v204 = vpop.f32.mrf.mxu0
  %v205 = vadd.f32 0.0, %v204
  %206 = vmatmul.bf16.gmra.mxu0 %v126
  %v207 = vpop.f32.mrf.mxu0
  %v208 = vadd.f32 0.0, %v207
  %v209 = vpop.f32.mrf.mxu0
  %v210 = vadd.f32 0.0, %v209
  %211 = vmatmul.bf16.gmra.mxu0 %v127
  %v212 = vpop.f32.mrf.mxu0
  %v213 = vadd.f32 0.0, %v212
  %v214 = vpop.f32.mrf.mxu0
  %v215 = vadd.f32 0.0, %v214
  %216 = vmatmul.bf16.gmra.mxu0 %v128
  %v217 = vpop.f32.mrf.mxu0
  %v218 = vadd.f32 0.0, %v217
  %v219 = vpop.f32.mrf.mxu0
  %v220 = vadd.f32 0.0, %v219
  %221 = vmatmul.bf16.gmra.mxu0 %v129
  %v222 = vpop.f32.mrf.mxu0
  %v223 = vadd.f32 0.0, %v222
  %v224 = vpop.f32.mrf.mxu0
  %v225 = vadd.f32 0.0, %v224
  %226 = vmatmul.bf16.gmra.mxu0 %v130
  %v227 = vpop.f32.mrf.mxu0
  %v228 = vadd.f32 0.0, %v227
  %v229 = vpop.f32.mrf.mxu0
  %v230 = vadd.f32 0.0, %v229
  %231 = vmatmul.bf16.gmra.mxu0 %v131
  %v232 = vpop.f32.mrf.mxu0
  %v233 = vadd.f32 0.0, %v232
  %v234 = vpop.f32.mrf.mxu0
  %v235 = vadd.f32 0.0, %v234
  %236 = vdwg.mxu0
  %v237 = vadd.f32 %v44, %v198
  %v238 = vadd.f32 %v45, %v200
  %v239 = vadd.f32 %v46, %v203
  %v240 = vadd.f32 %v47, %v205
  %v241 = vadd.f32 %v48, %v208
  %v242 = vadd.f32 %v49, %v210
  %v243 = vadd.f32 %v50, %v213
  %v244 = vadd.f32 %v51, %v215
  %v245 = vadd.f32 %v52, %v218
  %v246 = vadd.f32 %v53, %v220
  %v247 = vadd.f32 %v54, %v223
  %v248 = vadd.f32 %v55, %v225
  %v249 = vadd.f32 %v56, %v228
  %v250 = vadd.f32 %v57, %v230
  %v251 = vadd.f32 %v58, %v233
  %v252 = vadd.f32 %v59, %v235
  %vm253 = vcmask 64512
  %254 = vst.msk [vmem:[#allocation2] sm:$0xff] %vm253, %v237
  %255 = vst.msk [vmem:[#allocation2 + $0x8] sm:$0xff] %vm253, %v238
  %256 = vst.msk [vmem:[#allocation2 + $0x10] sm:$0xff] %vm253, %v239
  %257 = vst.msk [vmem:[#allocation2 + $0x18] sm:$0xff] %vm253, %v240
  %258 = vst.msk [vmem:[#allocation2 + $0x20] sm:$0xff] %vm253, %v241
  %259 = vst.msk [vmem:[#allocation2 + $0x28] sm:$0xff] %vm253, %v242
  %260 = vst.msk [vmem:[#allocation2 + $0x30] sm:$0xff] %vm253, %v243
  %261 = vst.msk [vmem:[#allocation2 + $0x38] sm:$0xff] %vm253, %v244
  %262 = vst.msk [vmem:[#allocation2 + $0x40] sm:$0xff] %vm253, %v245
  %263 = vst.msk [vmem:[#allocation2 + $0x48] sm:$0xff] %vm253, %v246
  %264 = vst.msk [vmem:[#allocation2 + $0x50] sm:$0xff] %vm253, %v247
  %265 = vst.msk [vmem:[#allocation2 + $0x58] sm:$0xff] %vm253, %v248
  %266 = vst.msk [vmem:[#allocation2 + $0x60] sm:$0xff] %vm253, %v249
  %267 = vst.msk [vmem:[#allocation2 + $0x68] sm:$0xff] %vm253, %v250
  %268 = vst.msk [vmem:[#allocation2 + $0x70] sm:$0xff] %vm253, %v251
  %269 = vst.msk [vmem:[#allocation2 + $0x78] sm:$0xff] %vm253, %v252
  // Predicated region
  $region30: #{gae_forward.3} parent=0 // pred_check
    %p270 = pneg %p23
  $region31: #{gae_forward.3} parent=0 // pred_check_branch
    %272 = sbr.rel (%p270) target = $region33
  $region32: #{gae_forward.3} parent=0 // pred_region
    %v273 = vld [vmem:[#allocation2] sm:$0xff]
    %v274 = vld [vmem:[#allocation2 + $0x8] sm:$0xff]
    %v275 = vld [vmem:[#allocation2 + $0x10] sm:$0xff]
    %v276 = vld [vmem:[#allocation2 + $0x18] sm:$0xff]
    %v277 = vld [vmem:[#allocation2 + $0x20] sm:$0xff]
    %v278 = vld [vmem:[#allocation2 + $0x28] sm:$0xff]
    %v279 = vld [vmem:[#allocation2 + $0x30] sm:$0xff]
    %v280 = vld [vmem:[#allocation2 + $0x38] sm:$0xff]
    %v281 = vld [vmem:[#allocation2 + $0x40] sm:$0xff]
    %v282 = vld [vmem:[#allocation2 + $0x48] sm:$0xff]
    %v283 = vld [vmem:[#allocation2 + $0x50] sm:$0xff]
    %v284 = vld [vmem:[#allocation2 + $0x58] sm:$0xff]
    %v285 = vld [vmem:[#allocation2 + $0x60] sm:$0xff]
    %v286 = vld [vmem:[#allocation2 + $0x68] sm:$0xff]
    %v287 = vld [vmem:[#allocation2 + $0x70] sm:$0xff]
    %v288 = vld [vmem:[#allocation2 + $0x78] sm:$0xff]
    %v289 = vld [vmem:[%s2] sm:$0xff]
    %v290 = vld [vmem:[%s2 + $0x8] sm:$0xff]
    %v291 = vld [vmem:[%s2 + $0x10] sm:$0xff]
    %v292 = vld [vmem:[%s2 + $0x18] sm:$0xff]
    %v293 = vld [vmem:[%s2 + $0x20] sm:$0xff]
    %v294 = vld [vmem:[%s2 + $0x28] sm:$0xff]
    %v295 = vld [vmem:[%s2 + $0x30] sm:$0xff]
    %v296 = vld [vmem:[%s2 + $0x38] sm:$0xff]
    %v297 = vld [vmem:[%s2 + $0x40] sm:$0xff]
    %v298 = vld [vmem:[%s2 + $0x48] sm:$0xff]
    %v299 = vld [vmem:[%s2 + $0x50] sm:$0xff]
    %v300 = vld [vmem:[%s2 + $0x58] sm:$0xff]
    %v301 = vld [vmem:[%s2 + $0x60] sm:$0xff]
    %v302 = vld [vmem:[%s2 + $0x68] sm:$0xff]
    %v303 = vld [vmem:[%s2 + $0x70] sm:$0xff]
    %v304 = vld [vmem:[%s2 + $0x78] sm:$0xff]
    %306 = vset.pattern.permute.xlu0 0
    %307 = vperm.xlu0 %306, %v289
    %v308 = vpop.permute.xlu0 %307
    %311 = vset.pattern.permute.xlu0 0
    %312 = vperm.xlu0 %311, %v290
    %v313 = vpop.permute.xlu0 %312
    %316 = vset.pattern.permute.xlu0 0
    %317 = vperm.xlu0 %316, %v291
    %v318 = vpop.permute.xlu0 %317
    %321 = vset.pattern.permute.xlu0 0
    %322 = vperm.xlu0 %321, %v292
    %v323 = vpop.permute.xlu0 %322
    %326 = vset.pattern.permute.xlu0 0
    %327 = vperm.xlu0 %326, %v293
    %v328 = vpop.permute.xlu0 %327
    %331 = vset.pattern.permute.xlu0 0
    %332 = vperm.xlu0 %331, %v294
    %v333 = vpop.permute.xlu0 %332
    %336 = vset.pattern.permute.xlu0 0
    %337 = vperm.xlu0 %336, %v295
    %v338 = vpop.permute.xlu0 %337
    %341 = vset.pattern.permute.xlu0 0
    %342 = vperm.xlu0 %341, %v296
    %v343 = vpop.permute.xlu0 %342
    %346 = vset.pattern.permute.xlu0 0
    %347 = vperm.xlu0 %346, %v297
    %v348 = vpop.permute.xlu0 %347
    %351 = vset.pattern.permute.xlu0 0
    %352 = vperm.xlu0 %351, %v298
    %v353 = vpop.permute.xlu0 %352
    %356 = vset.pattern.permute.xlu0 0
    %357 = vperm.xlu0 %356, %v299
    %v358 = vpop.permute.xlu0 %357
    %361 = vset.pattern.permute.xlu0 0
    %362 = vperm.xlu0 %361, %v300
    %v363 = vpop.permute.xlu0 %362
    %366 = vset.pattern.permute.xlu0 0
    %367 = vperm.xlu0 %366, %v301
    %v368 = vpop.permute.xlu0 %367
    %371 = vset.pattern.permute.xlu0 0
    %372 = vperm.xlu0 %371, %v302
    %v373 = vpop.permute.xlu0 %372
    %376 = vset.pattern.permute.xlu0 0
    %377 = vperm.xlu0 %376, %v303
    %v378 = vpop.permute.xlu0 %377
    %381 = vset.pattern.permute.xlu0 0
    %382 = vperm.xlu0 %381, %v304
    %v383 = vpop.permute.xlu0 %382
    %v385 = vmul.f32 %v273, %v308
    %v386 = vmul.f32 %v274, %v313
    %v387 = vmul.f32 %v275, %v318
    %v388 = vmul.f32 %v276, %v323
    %v389 = vmul.f32 %v277, %v328
    %v390 = vmul.f32 %v278, %v333
    %v391 = vmul.f32 %v279, %v338
    %v392 = vmul.f32 %v280, %v343
    %v393 = vmul.f32 %v281, %v348
    %v394 = vmul.f32 %v282, %v353
    %v395 = vmul.f32 %v283, %v358
    %v396 = vmul.f32 %v284, %v363
    %v397 = vmul.f32 %v285, %v368
    %v398 = vmul.f32 %v286, %v373
    %v399 = vmul.f32 %v287, %v378
    %v400 = vmul.f32 %v288, %v383
    %v401 = vld [vmem:[%s3] sm:$0xff]
    %v402 = vld [vmem:[%s4] sm:$0x1]
    %v404 = vperm.slane %v402, 0
    %v407 = vsel %vm253, %v385, 0
    %v410 = vsel %vm253, %v386, 0
    %v413 = vsel %vm253, %v387, 0
    %v416 = vsel %vm253, %v388, 0
    %v419 = vsel %vm253, %v389, 0
    %v422 = vsel %vm253, %v390, 0
    %v425 = vsel %vm253, %v391, 0
    %v428 = vsel %vm253, %v392, 0
    %v431 = vsel %vm253, %v393, 0
    %v434 = vsel %vm253, %v394, 0
    %v437 = vsel %vm253, %v395, 0
    %v440 = vsel %vm253, %v396, 0
    %v443 = vsel %vm253, %v397, 0
    %v446 = vsel %vm253, %v398, 0
    %v449 = vsel %vm253, %v399, 0
    %v452 = vsel %vm253, %v400, 0
    %454 = vmatpush.msra.mxu0 0.0
    %455 = vmatpush.msra.mxu0 0.0
    %456 = vmatpush.msra.mxu0 0.0
    %457 = vmatpush.msra.mxu0 0.0
    %458 = vmatpush.msra.mxu0 0.0
    %459 = vmatpush.msra.mxu0 0.0
    %460 = vmatpush.msra.mxu0 0.0
    %461 = vmatpush.msra.mxu0 0.0
    %462 = vmatpush.msra.mxu0 0.0
    %463 = vmatpush.msra.mxu0 0.0
    %464 = vmatpush.msra.mxu0 0.0
    %465 = vmatpush.msra.mxu0 0.0
    %466 = vmatpush.msra.mxu0 0.0
    %467 = vmatpush.msra.mxu0 0.0
    %468 = vmatpush.msra.mxu0 0.0
    %469 = vmatpush.msra.mxu0 %v401
    %470 = vmatmul.f32.gmra.mxu0 %v407
    %v471 = vpop.f32.mrf.mxu0
    %v472 = vadd.f32 %v404, %v471
    %473 = vmatmul.f32.gmra.mxu0 %v410
    %v474 = vpop.f32.mrf.mxu0
    %v475 = vadd.f32 %v404, %v474
    %476 = vmatmul.f32.gmra.mxu0 %v413
    %v477 = vpop.f32.mrf.mxu0
    %v478 = vadd.f32 %v404, %v477
    %479 = vmatmul.f32.gmra.mxu0 %v416
    %v480 = vpop.f32.mrf.mxu0
    %v481 = vadd.f32 %v404, %v480
    %482 = vmatmul.f32.gmra.mxu0 %v419
    %v483 = vpop.f32.mrf.mxu0
    %v484 = vadd.f32 %v404, %v483
    %485 = vmatmul.f32.gmra.mxu0 %v422
    %v486 = vpop.f32.mrf.mxu0
    %v487 = vadd.f32 %v404, %v486
    %488 = vmatmul.f32.gmra.mxu0 %v425
    %v489 = vpop.f32.mrf.mxu0
    %v490 = vadd.f32 %v404, %v489
    %491 = vmatmul.f32.gmra.mxu0 %v428
    %v492 = vpop.f32.mrf.mxu0
    %v493 = vadd.f32 %v404, %v492
    %494 = vmatmul.f32.gmra.mxu0 %v431
    %v495 = vpop.f32.mrf.mxu0
    %v496 = vadd.f32 %v404, %v495
    %497 = vmatmul.f32.gmra.mxu0 %v434
    %v498 = vpop.f32.mrf.mxu0
    %v499 = vadd.f32 %v404, %v498
    %500 = vmatmul.f32.gmra.mxu0 %v437
    %v501 = vpop.f32.mrf.mxu0
    %v502 = vadd.f32 %v404, %v501
    %503 = vmatmul.f32.gmra.mxu0 %v440
    %v504 = vpop.f32.mrf.mxu0
    %v505 = vadd.f32 %v404, %v504
    %506 = vmatmul.f32.gmra.mxu0 %v443
    %v507 = vpop.f32.mrf.mxu0
    %v508 = vadd.f32 %v404, %v507
    %509 = vmatmul.f32.gmra.mxu0 %v446
    %v510 = vpop.f32.mrf.mxu0
    %v511 = vadd.f32 %v404, %v510
    %512 = vmatmul.f32.gmra.mxu0 %v449
    %v513 = vpop.f32.mrf.mxu0
    %v514 = vadd.f32 %v404, %v513
    %515 = vmatmul.f32.gmra.mxu0 %v452
    %v516 = vpop.f32.mrf.mxu0
    %v517 = vadd.f32 %v404, %v516
    %518 = vdwg.mxu0
    %v519 = vmax.f32 %v472, 0.0
    %v520 = vmax.f32 %v475, 0.0
    %v521 = vmax.f32 %v478, 0.0
    %v522 = vmax.f32 %v481, 0.0
    %v523 = vmax.f32 %v484, 0.0
    %v524 = vmax.f32 %v487, 0.0
    %v525 = vmax.f32 %v490, 0.0
    %v526 = vmax.f32 %v493, 0.0
    %v527 = vmax.f32 %v496, 0.0
    %v528 = vmax.f32 %v499, 0.0
    %v529 = vmax.f32 %v502, 0.0
    %v530 = vmax.f32 %v505, 0.0
    %v531 = vmax.f32 %v508, 0.0
    %v532 = vmax.f32 %v511, 0.0
    %v533 = vmax.f32 %v514, 0.0
    %v534 = vmax.f32 %v517, 0.0
    %v535 = vld [vmem:[%s5] sm:$0xff]
    %v536 = vld [vmem:[%s5 + $0x8] sm:$0xff]
    %v537 = vld [vmem:[%s5 + $0x10] sm:$0xff]
    %v538 = vld [vmem:[%s5 + $0x18] sm:$0xff]
    %vm539 = vcmask 261120
    %v541 = vsel %vm539, %v519, 0
    %v544 = vsel %vm539, %v520, 0
    %v547 = vsel %vm539, %v521, 0
    %v550 = vsel %vm539, %v522, 0
    %v553 = vsel %vm539, %v523, 0
    %v556 = vsel %vm539, %v524, 0
    %v559 = vsel %vm539, %v525, 0
    %v562 = vsel %vm539, %v526, 0
    %v565 = vsel %vm539, %v527, 0
    %v568 = vsel %vm539, %v528, 0
    %v571 = vsel %vm539, %v529, 0
    %v574 = vsel %vm539, %v530, 0
    %v577 = vsel %vm539, %v531, 0
    %v580 = vsel %vm539, %v532, 0
    %v583 = vsel %vm539, %v533, 0
    %v586 = vsel %vm539, %v534, 0
    %588 = vmatpush.msra.mxu0 0.0
    %589 = vmatpush.msra.mxu0 0.0
    %590 = vmatpush.msra.mxu0 0.0
    %591 = vmatpush.msra.mxu0 0.0
    %592 = vmatpush.msra.mxu0 0.0
    %593 = vmatpush.msra.mxu0 0.0
    %594 = vmatpush.msra.mxu0 0.0
    %595 = vmatpush.msra.mxu0 0.0
    %596 = vmatpush.msra.mxu0 0.0
    %597 = vmatpush.msra.mxu0 0.0
    %598 = vmatpush.msra.mxu0 0.0
    %599 = vmatpush.msra.mxu0 0.0
    %600 = vmatpush.msra.mxu0 %v538
    %601 = vmatpush.msra.mxu0 %v537
    %602 = vmatpush.msra.mxu0 %v536
    %603 = vmatpush.msra.mxu0 %v535
    %604 = vmatmul.f32.gmra.mxu0 %v541
    %v605 = vpop.f32.mrf.mxu0
    %v606 = vadd.f32 0.0, %v605
    %607 = vmatmul.f32.gmra.mxu0 %v544
    %v608 = vpop.f32.mrf.mxu0
    %v609 = vadd.f32 0.0, %v608
    %610 = vmatmul.f32.gmra.mxu0 %v547
    %v611 = vpop.f32.mrf.mxu0
    %v612 = vadd.f32 0.0, %v611
    %613 = vmatmul.f32.gmra.mxu0 %v550
    %v614 = vpop.f32.mrf.mxu0
    %v615 = vadd.f32 0.0, %v614
    %616 = vmatmul.f32.gmra.mxu0 %v553
    %v617 = vpop.f32.mrf.mxu0
    %v618 = vadd.f32 0.0, %v617
    %619 = vmatmul.f32.gmra.mxu0 %v556
    %v620 = vpop.f32.mrf.mxu0
    %v621 = vadd.f32 0.0, %v620
    %622 = vmatmul.f32.gmra.mxu0 %v559
    %v623 = vpop.f32.mrf.mxu0
    %v624 = vadd.f32 0.0, %v623
    %625 = vmatmul.f32.gmra.mxu0 %v562
    %v626 = vpop.f32.mrf.mxu0
    %v627 = vadd.f32 0.0, %v626
    %628 = vmatmul.f32.gmra.mxu0 %v565
    %v629 = vpop.f32.mrf.mxu0
    %v630 = vadd.f32 0.0, %v629
    %631 = vmatmul.f32.gmra.mxu0 %v568
    %v632 = vpop.f32.mrf.mxu0
    %v633 = vadd.f32 0.0, %v632
    %634 = vmatmul.f32.gmra.mxu0 %v571
    %v635 = vpop.f32.mrf.mxu0
    %v636 = vadd.f32 0.0, %v635
    %637 = vmatmul.f32.gmra.mxu0 %v574
    %v638 = vpop.f32.mrf.mxu0
    %v639 = vadd.f32 0.0, %v638
    %640 = vmatmul.f32.gmra.mxu0 %v577
    %v641 = vpop.f32.mrf.mxu0
    %v642 = vadd.f32 0.0, %v641
    %643 = vmatmul.f32.gmra.mxu0 %v580
    %v644 = vpop.f32.mrf.mxu0
    %v645 = vadd.f32 0.0, %v644
    %646 = vmatmul.f32.gmra.mxu0 %v583
    %v647 = vpop.f32.mrf.mxu0
    %v648 = vadd.f32 0.0, %v647
    %649 = vmatmul.f32.gmra.mxu0 %v586
    %v650 = vpop.f32.mrf.mxu0
    %v651 = vadd.f32 0.0, %v650
    %652 = vdwg.mxu0
    %v653 = vmul.f32 %v606, %v308
    %v654 = vmul.f32 %v609, %v313
    %v655 = vmul.f32 %v612, %v318
    %v656 = vmul.f32 %v615, %v323
    %v657 = vmul.f32 %v618, %v328
    %v658 = vmul.f32 %v621, %v333
    %v659 = vmul.f32 %v624, %v338
    %v660 = vmul.f32 %v627, %v343
    %v661 = vmul.f32 %v630, %v348
    %v662 = vmul.f32 %v633, %v353
    %v663 = vmul.f32 %v636, %v358
    %v664 = vmul.f32 %v639, %v363
    %v665 = vmul.f32 %v642, %v368
    %v666 = vmul.f32 %v645, %v373
    %v667 = vmul.f32 %v648, %v378
    %v668 = vmul.f32 %v651, %v383
    %v669 = vpack.c.bf16 %v653, %v653
    %v670 = vpack.c.bf16 %v654, %v654
    %v671 = vpack.c.bf16 %v655, %v655
    %v672 = vpack.c.bf16 %v656, %v656
    %v673 = vpack.c.bf16 %v657, %v657
    %v674 = vpack.c.bf16 %v658, %v658
    %v675 = vpack.c.bf16 %v659, %v659
    %v676 = vpack.c.bf16 %v660, %v660
    %v677 = vpack.c.bf16 %v661, %v661
    %v678 = vpack.c.bf16 %v662, %v662
    %v679 = vpack.c.bf16 %v663, %v663
    %v680 = vpack.c.bf16 %v664, %v664
    %v681 = vpack.c.bf16 %v665, %v665
    %v682 = vpack.c.bf16 %v666, %v666
    %v683 = vpack.c.bf16 %v667, %v667
    %v684 = vpack.c.bf16 %v668, %v668
    %685 = vst [vmem:[%s6] sm:$0xf] %v669
    %686 = vst [vmem:[%s6 + $0x4] sm:$0xf] %v670
    %687 = vst [vmem:[%s6 + $0x8] sm:$0xf] %v671
    %688 = vst [vmem:[%s6 + $0xc] sm:$0xf] %v672
    %689 = vst [vmem:[%s6 + $0x10] sm:$0xf] %v673
    %690 = vst [vmem:[%s6 + $0x14] sm:$0xf] %v674
    %691 = vst [vmem:[%s6 + $0x18] sm:$0xf] %v675
    %692 = vst [vmem:[%s6 + $0x1c] sm:$0xf] %v676
    %693 = vst [vmem:[%s6 + $0x20] sm:$0xf] %v677
    %694 = vst [vmem:[%s6 + $0x24] sm:$0xf] %v678
    %695 = vst [vmem:[%s6 + $0x28] sm:$0xf] %v679
    %696 = vst [vmem:[%s6 + $0x2c] sm:$0xf] %v680
    %697 = vst [vmem:[%s6 + $0x30] sm:$0xf] %v681
    %698 = vst [vmem:[%s6 + $0x34] sm:$0xf] %v682
    %699 = vst [vmem:[%s6 + $0x38] sm:$0xf] %v683
    %700 = vst [vmem:[%s6 + $0x3c] sm:$0xf] %v684
  $region33: #{gae_forward.3} parent=0 // pred_fallthru
    _
  // Predicated region
  $region34: #{gae_forward.3} parent=0 // pred_check
    _
  $region35: #{gae_forward.3} parent=0 // pred_check_branch
    %702 = sbr.rel (0) target = $region37
  $region36: #{gae_forward.3} parent=0 // pred_region
    _
  $region37: #{gae_forward.3} parent=0 // pred_fallthru
    _
  // Predicated region
  $region38: #{gae_forward.3} parent=0 // pred_check
    _
  $region39: #{gae_forward.3} parent=0 // pred_check_branch
    %704 = sbr.rel (0) target = $region41
  $region40: #{gae_forward.3} parent=0 // pred_region
    _
  $region41: #{gae_forward.3} parent=0 // pred_fallthru
    _

</llo_original>
